<compile_context>
chip_gen: v5e
topology: v5e:2x2
jax: 0.10.0
libtpu: 0.0.40
codegen_flags: <defaults>
</compile_context>

<pallas_src>
import functools

import numpy as np
import jax
import jax.numpy as jnp
from jax.experimental import pallas as pl
from jax.experimental.pallas import tpu as pltpu

EPS = 1e-5  # PyTorch BatchNorm1d default eps


def _round_up(v, m):
    return ((v + m - 1) // m) * m


# ----------------------------------------------------------------------------
# Fused kernel
#   grid = (num_node_tiles, max_edge_blocks_per_tile)
#   edge axis: reduction ('arbitrary', last) -> accumulate agg in f32 scratch
#   node axis: 'parallel' (sharded across TensorCores where available)
#   On the last edge step, run the whole (statically unrolled) layer stack on
#   the resident x tile + agg accumulator and write the output tile once.
# ----------------------------------------------------------------------------
def fused_gin_kernel(tbl_ref, dst_ref, eattr_ref, x_ref, *rest, n_layers):
    param_refs = rest[:-2]          # 4 refs per layer: w1, b1, w2, b2
    o_ref = rest[-2]
    agg_ref = rest[-1]              # f32 VMEM scratch accumulator (tN, C_in)

    n = pl.program_id(0)
    e = pl.program_id(1)
    tN = agg_ref.shape[0]

    @pl.when(e == 0)
    def _():
        agg_ref[...] = jnp.zeros_like(agg_ref)

    # Scatter-add of this edge block into the node-tile accumulator, skipped
    # entirely when (with sorted edges) the block cannot contain this tile's
    # destinations.
    n_my_blocks = tbl_ref[2 * n + 1]

    @pl.when(e < n_my_blocks)
    def _():
        node_base = n * tN
        # (tN, 1) sublane iota of absolute node ids; the compare broadcasts it
        # against the lane-dense (1, tE) dst row.  Padded edges carry a huge
        # sentinel dst and never match.
        row_ids = jax.lax.broadcasted_iota(jnp.int32, (tN, 1), 0) + node_base
        onehot = (row_ids == dst_ref[...]).astype(jnp.bfloat16)     # (tN, tE)
        agg_ref[...] += jnp.dot(onehot, eattr_ref[...],
                                preferred_element_type=jnp.float32)

    # Last edge step: run the unrolled layer stack and write the output tile.
    @pl.when(e == pl.num_programs(1) - 1)
    def _():
        agg_bf = agg_ref[...].astype(jnp.bfloat16)
        h = x_ref[...]                                               # bf16
        for li in range(n_layers):
            w1, b1, w2, b2 = param_refs[4 * li: 4 * li + 4]
            # Pre-layer BN (i != 0) and the MLP hidden BN are folded into
            # (w1, b1) / (w2, b2) in the wrapper (eval-mode exact).
            hin = jnp.concatenate([h.astype(jnp.bfloat16), agg_bf], axis=-1)
            z = (jnp.dot(hin, w1[...], preferred_element_type=jnp.float32)
                 + b1[...])
            z = jnp.maximum(z, 0.0)                                  # ReLU (f32)
            h = (jnp.dot(z.astype(jnp.bfloat16), w2[...],
                         preferred_element_type=jnp.float32)
                 + b2[...])
        o_ref[...] = h.astype(o_ref.dtype)


# ----------------------------------------------------------------------------
# Wrapper: BN folding, edge sorting + block schedule, padding, pallas_call
# ----------------------------------------------------------------------------
def _fold_layer(p, apply_pre_bn, pad_out_to=None):
    """Fold eval-mode BatchNorms into the adjacent Linears (exact affine),
    fuse the two first-Linear weights, optionally pad the output columns."""
    w1x, w1a, b1 = p["w1x"], p["w1a"], p["b1"]
    w2, b2 = p["w2"], p["b2"]
    if apply_pre_bn:
        gamma, beta, mean, var = p["prebn"]
        scale = gamma * jax.lax.rsqrt(var + EPS)
        shift = beta - mean * scale
        b1 = b1 + shift[None, :] @ w1x
        w1x = scale[:, None] * w1x
    gamma2, beta2, mean2, var2 = p["bn_mlp"]
    scale2 = gamma2 * jax.lax.rsqrt(var2 + EPS)
    shift2 = beta2 - mean2 * scale2
    b2 = b2 + shift2[None, :] @ w2
    w2 = scale2[:, None] * w2
    # Fuse the x-path and agg-path weights along K so the kernel does a single
    # MXU pass per layer on concat([h, agg], -1).
    w1 = jnp.concatenate([w1x, w1a], axis=0)
    if pad_out_to is not None:
        oc = w2.shape[1]
        w2 = jnp.pad(w2, ((0, 0), (0, pad_out_to - oc)))
        b2 = jnp.pad(b2, ((0, 0), (0, pad_out_to - oc)))
    # bf16 weights for the MXU; biases stay f32 for the element-wise path.
    return [w1.astype(jnp.bfloat16), b1.astype(jnp.float32),
            w2.astype(jnp.bfloat16), b2.astype(jnp.float32)]


def gin_tg_forward(x, edge_index, edge_attr, params, *, tile_n=256, tile_e=256):
    N, C_in = x.shape
    E = edge_attr.shape[0]
    out_ch = params[-1]["w2"].shape[1]
    n_layers = len(params)
    out_ch_pad = _round_up(out_ch, 128)        # lane-dense output stores

    # Tile sizes: 8-aligned for the sublane constraint, capped so tiny graphs
    # don't over-pad.  tE kept modest so the one-hot working set stays in vregs.
    tN = min(tile_n, _round_up(N, 8))
    tE = min(tile_e, _round_up(E, 8))
    N_pad = _round_up(N, tN)
    E_pad = _round_up(E, tE)
    n_ntiles = N_pad // tN
    n_eblk = E_pad // tE

    # ---- sort edges by destination ------------------------------------------
    dst = jnp.asarray(edge_index[1], jnp.int32)
    order = jnp.argsort(dst)
    dst_sorted = dst[order]
    ea_sorted = jnp.asarray(edge_attr, jnp.float32)[order]

    # dst stored lane-dense (1, E_pad); padded slots get a sentinel that can
    # never match a node id (node ids are < N_pad << 2**30).
    dst_row = jnp.full((1, E_pad), jnp.int32(2 ** 30))
    dst_row = dst_row.at[0, :E].set(dst_sorted)
    ea_p = jnp.zeros((E_pad, C_in), jnp.bfloat16).at[:E].set(
        ea_sorted.astype(jnp.bfloat16))
    x_p = jnp.zeros((N_pad, C_in), jnp.bfloat16).at[:N].set(
        x.astype(jnp.bfloat16))

    # ---- per-node-tile edge-block schedule (scalar-prefetched -> SMEM) ------
    dst_np = np.asarray(dst_sorted)
    bounds = np.arange(n_ntiles + 1, dtype=np.int64) * tN
    lo = np.searchsorted(dst_np, bounds[:-1], side="left")
    hi = np.searchsorted(dst_np, bounds[1:], side="left")
    blk_start = np.minimum(lo // tE, n_eblk - 1)
    blk_count = np.where(hi > lo, (hi + tE - 1) // tE - lo // tE, 0)
    max_blocks = max(1, int(blk_count.max()))
    tbl = jnp.asarray(np.stack([blk_start, blk_count], axis=1).reshape(-1),
                      jnp.int32)                       # flat [start0,cnt0,...]

    # ---- fold BN into the Linears, flatten params ----------------------------
    flat_params = []
    for li, p in enumerate(params):
        flat_params.extend(_fold_layer(
            p, apply_pre_bn=(li != 0),
            pad_out_to=out_ch_pad if li == n_layers - 1 else None))

    def edge_blk(n, e, tbl_ref):
        # Data-dependent edge-block index; clamp keeps padded steps in range.
        return jnp.minimum(tbl_ref[2 * n] + e, n_eblk - 1)

    in_specs = [
        pl.BlockSpec((1, tE), lambda n, e, t: (0, edge_blk(n, e, t))),     # dst
        pl.BlockSpec((tE, C_in), lambda n, e, t: (edge_blk(n, e, t), 0)),  # edge_attr
        pl.BlockSpec((tN, C_in), lambda n, e, t: (n, 0)),                  # x (resident)
    ]
    # Weights/biases: whole-array blocks, constant index map -> VMEM-resident.
    in_specs += [pl.BlockSpec(a.shape, lambda n, e, t: (0, 0)) for a in flat_params]

    # Explicit VMEM budget (2x buffered streamed tiles + 2x weights + output
    # buffers + agg scratch), clamped to [16 MiB, 64 MiB] so it also fits v7x.
    param_bytes = sum(int(a.size) * a.dtype.itemsize for a in flat_params)
    stream_bytes = tE * 4 + tE * C_in * 2 + tN * C_in * 2
    footprint = (2 * stream_bytes + 2 * param_bytes
                 + 2 * tN * out_ch_pad * 4 + tN * C_in * 4)
    vmem_limit = int(min(64 * 1024 * 1024,
                         max(2 * footprint + (4 << 20), 16 * 1024 * 1024)))

    kernel = functools.partial(fused_gin_kernel, n_layers=n_layers)
    out = pl.pallas_call(
        kernel,
        out_shape=jax.ShapeDtypeStruct((N_pad, out_ch_pad), jnp.float32),
        grid_spec=pltpu.PrefetchScalarGridSpec(
            num_scalar_prefetch=1,
            grid=(n_ntiles, max_blocks),
            in_specs=in_specs,
            out_specs=pl.BlockSpec((tN, out_ch_pad), lambda n, e, t: (n, 0)),
            scratch_shapes=[pltpu.VMEM((tN, C_in), jnp.float32)]),
        compiler_params=pltpu.CompilerParams(
            dimension_semantics=("parallel", "arbitrary"),
            vmem_limit_bytes=vmem_limit),
    )(tbl, dst_row, ea_p, x_p, *flat_params)
    return out[:N, :out_ch]


# ----------------------------------------------------------------------------
# Parameters (non-trivial BN stats) + pure-JAX f32 reference for validation
# ----------------------------------------------------------------------------
def _random_bn(key, dim):
    kg, kb, km, kv = jax.random.split(key, 4)
    gamma = 1.0 + 0.3 * jax.random.normal(kg, (dim,), jnp.float32)
    beta = 0.2 * jax.random.normal(kb, (dim,), jnp.float32)
    mean = 0.2 * jax.random.normal(km, (dim,), jnp.float32)
    var = 0.5 + jax.random.uniform(kv, (dim,), jnp.float32)     # [0.5, 1.5)
    return jnp.stack([gamma, beta, mean, var])


def make_params(key, in_ch, hidden, out_ch, n_layers):
    params = []
    d_x = in_ch
    for li in range(n_layers):
        mlp_out = hidden if li < n_layers - 1 else out_ch
        key, k0, k1, k2, k3, k4, k5, k6 = jax.random.split(key, 8)
        s1 = 1.0 / jnp.sqrt(jnp.float32(d_x + in_ch))
        s2 = 1.0 / jnp.sqrt(jnp.float32(hidden))
        w1x = jax.random.normal(k0, (d_x, hidden), jnp.float32) * s1
        w1a = jax.random.normal(k1, (in_ch, hidden), jnp.float32) * s1
        b1 = jax.random.normal(k2, (1, hidden), jnp.float32) * 0.1
        w2 = jax.random.normal(k3, (hidden, mlp_out), jnp.float32) * s2
        b2 = jax.random.normal(k4, (1, mlp_out), jnp.float32) * 0.1
        params.append(dict(prebn=_random_bn(k6, d_x), w1x=w1x, w1a=w1a, b1=b1,
                           bn_mlp=_random_bn(k5, hidden), w2=w2, b2=b2))
        d_x = hidden
    return params


def gin_tg_reference(x, edge_index, edge_attr, params):
    dst = edge_index[1].astype(jnp.int32)
    agg = jnp.zeros((x.shape[0], edge_attr.shape[1]), jnp.float32).at[dst].add(
        edge_attr.astype(jnp.float32))
    h = x.astype(jnp.float32)
    for li, p in enumerate(params):
        if li != 0:
            g, beta, mean, var = p["prebn"]
            h = (h - mean) * jax.lax.rsqrt(var + EPS) * g + beta
        z = h @ p["w1x"] + agg @ p["w1a"] + p["b1"]
        z = jnp.maximum(z, 0.0)
        g2, beta2, mean2, var2 = p["bn_mlp"]
        z = (z - mean2) * jax.lax.rsqrt(var2 + EPS) * g2 + beta2
        h = z @ p["w2"] + p["b2"]
    return h


if __name__ == "__main__":
    N, E = 96, 384               # nodes, edges
    IN_CH, HIDDEN, OUT_CH = 8, 32, 16
    N_LAYERS = 3

    key = jax.random.PRNGKey(0)
    kx, ksrc, kdst, ke, kp = jax.random.split(key, 5)

    x = jax.random.normal(kx, (N, IN_CH), jnp.float32)
    src = jax.random.randint(ksrc, (E,), 0, N, jnp.int32)
    dst = jax.random.randint(kdst, (E,), 0, N, jnp.int32)
    edge_index = jnp.stack([src, dst], axis=0)                    # [2, E]
    pos_enc = jax.random.normal(ke, (E, IN_CH), jnp.float32)      # g.edata['pos_enc']

    params = make_params(kp, IN_CH, HIDDEN, OUT_CH, N_LAYERS)

    # tile_n=32 / tile_e=128 exercise multiple node tiles, multiple edge blocks
    # and the sorted-edge tile-skipping path even at this small size.
    out = gin_tg_forward(x, edge_index, pos_enc, params, tile_n=32, tile_e=128)
    out = jax.block_until_ready(out)
    assert out.shape == (N, OUT_CH) and out.dtype == jnp.float32

    ref = gin_tg_reference(x, edge_index, pos_enc, params)
    max_err = float(jnp.max(jnp.abs(out - ref)))
    tol = 3e-2 * (1.0 + float(jnp.max(jnp.abs(ref))))   # bf16-MXU / f32-accum budget
    assert max_err < tol, f"max abs error {max_err} exceeds tolerance {tol}"
    print("KERNEL_OK")
</pallas_src>

<mosaic_0001>
module attributes {stable_mosaic.version = 11 : i64} {
  func.func @fused_gin_kernel(%arg0: i32, %arg1: i32, %arg2: memref<6xi32, #tpu.memory_space<smem>>, %arg3: memref<1x128xi32, #tpu.memory_space<vmem>>, %arg4: memref<128x8xbf16, #tpu.memory_space<vmem>>, %arg5: memref<32x8xbf16, #tpu.memory_space<vmem>>, %arg6: memref<16x32xbf16, #tpu.memory_space<vmem>>, %arg7: memref<1x32xf32, #tpu.memory_space<vmem>>, %arg8: memref<32x32xbf16, #tpu.memory_space<vmem>>, %arg9: memref<1x32xf32, #tpu.memory_space<vmem>>, %arg10: memref<40x32xbf16, #tpu.memory_space<vmem>>, %arg11: memref<1x32xf32, #tpu.memory_space<vmem>>, %arg12: memref<32x32xbf16, #tpu.memory_space<vmem>>, %arg13: memref<1x32xf32, #tpu.memory_space<vmem>>, %arg14: memref<40x32xbf16, #tpu.memory_space<vmem>>, %arg15: memref<1x32xf32, #tpu.memory_space<vmem>>, %arg16: memref<32x128xbf16, #tpu.memory_space<vmem>>, %arg17: memref<1x128xf32, #tpu.memory_space<vmem>>, %arg18: memref<32x128xf32, #tpu.memory_space<vmem>>, %arg19: memref<32x8xf32, #tpu.memory_space<vmem>>) attributes {dimension_semantics = [#tpu.dimension_semantics<parallel>, #tpu.dimension_semantics<arbitrary>], iteration_bounds = array<i64: 3, 2>, scalar_prefetch = 1 : i64, scratch_operands = 1 : i64, tpu.core_type = #tpu.core_type<tc>, window_params = [{transform_indices = @transform_0, window_bounds = array<i64: 1, 128>}, {transform_indices = @transform_1, window_bounds = array<i64: 128, 8>}, {transform_indices = @transform_2, window_bounds = array<i64: 32, 8>}, {pipeline_mode = #tpu.pipeline_mode<synchronous>, transform_indices = @transform_3, window_bounds = array<i64: 16, 32>}, {pipeline_mode = #tpu.pipeline_mode<synchronous>, transform_indices = @transform_4, window_bounds = array<i64: 1, 32>}, {pipeline_mode = #tpu.pipeline_mode<synchronous>, transform_indices = @transform_5, window_bounds = array<i64: 32, 32>}, {pipeline_mode = #tpu.pipeline_mode<synchronous>, transform_indices = @transform_6, window_bounds = array<i64: 1, 32>}, {pipeline_mode = #tpu.pipeline_mode<synchronous>, transform_indices = @transform_7, window_bounds = array<i64: 40, 32>}, {pipeline_mode = #tpu.pipeline_mode<synchronous>, transform_indices = @transform_8, window_bounds = array<i64: 1, 32>}, {pipeline_mode = #tpu.pipeline_mode<synchronous>, transform_indices = @transform_9, window_bounds = array<i64: 32, 32>}, {pipeline_mode = #tpu.pipeline_mode<synchronous>, transform_indices = @transform_10, window_bounds = array<i64: 1, 32>}, {pipeline_mode = #tpu.pipeline_mode<synchronous>, transform_indices = @transform_11, window_bounds = array<i64: 40, 32>}, {pipeline_mode = #tpu.pipeline_mode<synchronous>, transform_indices = @transform_12, window_bounds = array<i64: 1, 32>}, {pipeline_mode = #tpu.pipeline_mode<synchronous>, transform_indices = @transform_13, window_bounds = array<i64: 32, 128>}, {pipeline_mode = #tpu.pipeline_mode<synchronous>, transform_indices = @transform_14, window_bounds = array<i64: 1, 128>}, {transform_indices = @transform_15, window_bounds = array<i64: 32, 128>}]} {
    %c0_i32 = arith.constant 0 : i32
    %0 = arith.cmpi eq, %arg1, %c0_i32 : i32
    %1 = arith.extui %0 : i1 to i32
    %c0_i32_0 = arith.constant 0 : i32
    %2 = arith.cmpi ne, %1, %c0_i32_0 : i32
    scf.if %2 {
      %cst = arith.constant 0.000000e+00 : f32
      %13 = vector.broadcast %cst : f32 to vector<32x8xf32>
      %c0 = arith.constant 0 : index
      %c0_4 = arith.constant 0 : index
      %14 = vector.load %arg19[%c0, %c0_4] : memref<32x8xf32, #tpu.memory_space<vmem>>, vector<32x8xf32>
      tpu.vector_store %arg19[%c0, %c0_4], %13 {strides = array<i32>} : memref<32x8xf32, #tpu.memory_space<vmem>>, vector<32x8xf32>,
    } else {
    }
    %c2_i32 = arith.constant 2 : i32
    %3 = arith.muli %c2_i32, %arg0 : i32
    %c1_i32 = arith.constant 1 : i32
    %4 = arith.addi %3, %c1_i32 : i32
    %5 = arith.index_cast %4 : i32 to index
    %6 = memref.load %arg2[%5] : memref<6xi32, #tpu.memory_space<smem>>
    %7 = arith.cmpi slt, %arg1, %6 : i32
    %8 = arith.extui %7 : i1 to i32
    %c0_i32_1 = arith.constant 0 : i32
    %9 = arith.cmpi ne, %8, %c0_i32_1 : i32
    scf.if %9 {
      %c32_i32 = arith.constant 32 : i32
      %13 = arith.muli %arg0, %c32_i32 : i32
      %14 = tpu.iota {dimensions = array<i32: 0>} : vector<32x1xi32>
      %15 = vector.broadcast %13 : i32 to vector<32x1xi32>
      %16 = arith.addi %14, %15 : vector<32x1xi32>
      %c0 = arith.constant 0 : index
      %c0_4 = arith.constant 0 : index
      %17 = vector.load %arg3[%c0, %c0_4] : memref<1x128xi32, #tpu.memory_space<vmem>>, vector<1x128xi32>
      %18 = vector.broadcast %16 : vector<32x1xi32> to vector<32x128xi32>
      %19 = vector.broadcast %17 : vector<1x128xi32> to vector<32x128xi32>
      %20 = arith.cmpi eq, %18, %19 : vector<32x128xi32>
      %21 = arith.extui %20 : vector<32x128xi1> to vector<32x128xi32>
      %22 = arith.sitofp %21 : vector<32x128xi32> to vector<32x128xf32>
      %23 = arith.truncf %22 : vector<32x128xf32> to vector<32x128xbf16>
      %c0_5 = arith.constant 0 : index
      %c0_6 = arith.constant 0 : index
      %24 = vector.load %arg19[%c0_5, %c0_6] : memref<32x8xf32, #tpu.memory_space<vmem>>, vector<32x8xf32>
      %c0_7 = arith.constant 0 : index
      %c0_8 = arith.constant 0 : index
      %25 = vector.load %arg4[%c0_7, %c0_8] : memref<128x8xbf16, #tpu.memory_space<vmem>>, vector<128x8xbf16>
      %cst = arith.constant dense<0.000000e+00> : vector<32x8xf32>
      %26 = tpu.matmul %23, %25, %cst {dimension_numbers = #tpu.dot_dimension_numbers<[1], [0], [0], [1], [0, 0, 1, 1], [], []>} : vector<32x128xbf16>, vector<128x8xbf16>, vector<32x8xf32> -> vector<32x8xf32>
      %27 = arith.addf %24, %26 : vector<32x8xf32>
      %c0_9 = arith.constant 0 : index
      %c0_10 = arith.constant 0 : index
      %28 = vector.load %arg19[%c0_9, %c0_10] : memref<32x8xf32, #tpu.memory_space<vmem>>, vector<32x8xf32>
      tpu.vector_store %arg19[%c0_9, %c0_10], %27 {strides = array<i32>} : memref<32x8xf32, #tpu.memory_space<vmem>>, vector<32x8xf32>,
    } else {
    }
    %c1_i32_2 = arith.constant 1 : i32
    %10 = arith.cmpi eq, %arg1, %c1_i32_2 : i32
    %11 = arith.extui %10 : i1 to i32
    %c0_i32_3 = arith.constant 0 : i32
    %12 = arith.cmpi ne, %11, %c0_i32_3 : i32
    scf.if %12 {
      %c0 = arith.constant 0 : index
      %c0_4 = arith.constant 0 : index
      %13 = vector.load %arg19[%c0, %c0_4] : memref<32x8xf32, #tpu.memory_space<vmem>>, vector<32x8xf32>
      %14 = arith.truncf %13 : vector<32x8xf32> to vector<32x8xbf16>
      %c0_5 = arith.constant 0 : index
      %c0_6 = arith.constant 0 : index
      %15 = vector.load %arg5[%c0_5, %c0_6] : memref<32x8xbf16, #tpu.memory_space<vmem>>, vector<32x8xbf16>
      %16 = tpu.concatenate %15, %14 in 1 : vector<32x8xbf16>, vector<32x8xbf16> -> vector<32x16xbf16>
      %c0_7 = arith.constant 0 : index
      %c0_8 = arith.constant 0 : index
      %17 = vector.load %arg6[%c0_7, %c0_8] : memref<16x32xbf16, #tpu.memory_space<vmem>>, vector<16x32xbf16>
      %cst = arith.constant dense<0.000000e+00> : vector<32x32xf32>
      %18 = tpu.matmul %16, %17, %cst {dimension_numbers = #tpu.dot_dimension_numbers<[1], [0], [0], [1], [0, 0, 1, 1], [], []>} : vector<32x16xbf16>, vector<16x32xbf16>, vector<32x32xf32> -> vector<32x32xf32>
      %c0_9 = arith.constant 0 : index
      %c0_10 = arith.constant 0 : index
      %19 = vector.load %arg7[%c0_9, %c0_10] : memref<1x32xf32, #tpu.memory_space<vmem>>, vector<1x32xf32>
      %20 = vector.broadcast %19 : vector<1x32xf32> to vector<32x32xf32>
      %21 = arith.addf %18, %20 : vector<32x32xf32>
      %cst_11 = arith.constant 0.000000e+00 : f32
      %22 = vector.broadcast %cst_11 : f32 to vector<32x32xf32>
      %23 = arith.maximumf %21, %22 : vector<32x32xf32>
      %24 = arith.truncf %23 : vector<32x32xf32> to vector<32x32xbf16>
      %c0_12 = arith.constant 0 : index
      %c0_13 = arith.constant 0 : index
      %25 = vector.load %arg8[%c0_12, %c0_13] : memref<32x32xbf16, #tpu.memory_space<vmem>>, vector<32x32xbf16>
      %cst_14 = arith.constant dense<0.000000e+00> : vector<32x32xf32>
      %26 = tpu.matmul %24, %25, %cst_14 {dimension_numbers = #tpu.dot_dimension_numbers<[1], [0], [0], [1], [0, 0, 1, 1], [], []>} : vector<32x32xbf16>, vector<32x32xbf16>, vector<32x32xf32> -> vector<32x32xf32>
      %c0_15 = arith.constant 0 : index
      %c0_16 = arith.constant 0 : index
      %27 = vector.load %arg9[%c0_15, %c0_16] : memref<1x32xf32, #tpu.memory_space<vmem>>, vector<1x32xf32>
      %28 = vector.broadcast %27 : vector<1x32xf32> to vector<32x32xf32>
      %29 = arith.addf %26, %28 : vector<32x32xf32>
      %30 = arith.truncf %29 : vector<32x32xf32> to vector<32x32xbf16>
      %31 = tpu.concatenate %30, %14 in 1 : vector<32x32xbf16>, vector<32x8xbf16> -> vector<32x40xbf16>
      %c0_17 = arith.constant 0 : index
      %c0_18 = arith.constant 0 : index
      %32 = vector.load %arg10[%c0_17, %c0_18] : memref<40x32xbf16, #tpu.memory_space<vmem>>, vector<40x32xbf16>
      %cst_19 = arith.constant dense<0.000000e+00> : vector<32x32xf32>
      %33 = tpu.matmul %31, %32, %cst_19 {dimension_numbers = #tpu.dot_dimension_numbers<[1], [0], [0], [1], [0, 0, 1, 1], [], []>} : vector<32x40xbf16>, vector<40x32xbf16>, vector<32x32xf32> -> vector<32x32xf32>
      %c0_20 = arith.constant 0 : index
      %c0_21 = arith.constant 0 : index
      %34 = vector.load %arg11[%c0_20, %c0_21] : memref<1x32xf32, #tpu.memory_space<vmem>>, vector<1x32xf32>
      %35 = vector.broadcast %34 : vector<1x32xf32> to vector<32x32xf32>
      %36 = arith.addf %33, %35 : vector<32x32xf32>
      %cst_22 = arith.constant 0.000000e+00 : f32
      %37 = vector.broadcast %cst_22 : f32 to vector<32x32xf32>
      %38 = arith.maximumf %36, %37 : vector<32x32xf32>
      %39 = arith.truncf %38 : vector<32x32xf32> to vector<32x32xbf16>
      %c0_23 = arith.constant 0 : index
      %c0_24 = arith.constant 0 : index
      %40 = vector.load %arg12[%c0_23, %c0_24] : memref<32x32xbf16, #tpu.memory_space<vmem>>, vector<32x32xbf16>
      %cst_25 = arith.constant dense<0.000000e+00> : vector<32x32xf32>
      %41 = tpu.matmul %39, %40, %cst_25 {dimension_numbers = #tpu.dot_dimension_numbers<[1], [0], [0], [1], [0, 0, 1, 1], [], []>} : vector<32x32xbf16>, vector<32x32xbf16>, vector<32x32xf32> -> vector<32x32xf32>
      %c0_26 = arith.constant 0 : index
      %c0_27 = arith.constant 0 : index
      %42 = vector.load %arg13[%c0_26, %c0_27] : memref<1x32xf32, #tpu.memory_space<vmem>>, vector<1x32xf32>
      %43 = vector.broadcast %42 : vector<1x32xf32> to vector<32x32xf32>
      %44 = arith.addf %41, %43 : vector<32x32xf32>
      %45 = arith.truncf %44 : vector<32x32xf32> to vector<32x32xbf16>
      %46 = tpu.concatenate %45, %14 in 1 : vector<32x32xbf16>, vector<32x8xbf16> -> vector<32x40xbf16>
      %c0_28 = arith.constant 0 : index
      %c0_29 = arith.constant 0 : index
      %47 = vector.load %arg14[%c0_28, %c0_29] : memref<40x32xbf16, #tpu.memory_space<vmem>>, vector<40x32xbf16>
      %cst_30 = arith.constant dense<0.000000e+00> : vector<32x32xf32>
      %48 = tpu.matmul %46, %47, %cst_30 {dimension_numbers = #tpu.dot_dimension_numbers<[1], [0], [0], [1], [0, 0, 1, 1], [], []>} : vector<32x40xbf16>, vector<40x32xbf16>, vector<32x32xf32> -> vector<32x32xf32>
      %c0_31 = arith.constant 0 : index
      %c0_32 = arith.constant 0 : index
      %49 = vector.load %arg15[%c0_31, %c0_32] : memref<1x32xf32, #tpu.memory_space<vmem>>, vector<1x32xf32>
      %50 = vector.broadcast %49 : vector<1x32xf32> to vector<32x32xf32>
      %51 = arith.addf %48, %50 : vector<32x32xf32>
      %cst_33 = arith.constant 0.000000e+00 : f32
      %52 = vector.broadcast %cst_33 : f32 to vector<32x32xf32>
      %53 = arith.maximumf %51, %52 : vector<32x32xf32>
      %54 = arith.truncf %53 : vector<32x32xf32> to vector<32x32xbf16>
      %c0_34 = arith.constant 0 : index
      %c0_35 = arith.constant 0 : index
      %55 = vector.load %arg16[%c0_34, %c0_35] : memref<32x128xbf16, #tpu.memory_space<vmem>>, vector<32x128xbf16>
      %cst_36 = arith.constant dense<0.000000e+00> : vector<32x128xf32>
      %56 = tpu.matmul %54, %55, %cst_36 {dimension_numbers = #tpu.dot_dimension_numbers<[1], [0], [0], [1], [0, 0, 1, 1], [], []>} : vector<32x32xbf16>, vector<32x128xbf16>, vector<32x128xf32> -> vector<32x128xf32>
      %c0_37 = arith.constant 0 : index
      %c0_38 = arith.constant 0 : index
      %57 = vector.load %arg17[%c0_37, %c0_38] : memref<1x128xf32, #tpu.memory_space<vmem>>, vector<1x128xf32>
      %58 = vector.broadcast %57 : vector<1x128xf32> to vector<32x128xf32>
      %59 = arith.addf %56, %58 : vector<32x128xf32>
      %c0_39 = arith.constant 0 : index
      %c0_40 = arith.constant 0 : index
      %60 = vector.load %arg18[%c0_39, %c0_40] : memref<32x128xf32, #tpu.memory_space<vmem>>, vector<32x128xf32>
      tpu.vector_store %arg18[%c0_39, %c0_40], %59 {strides = array<i32>} : memref<32x128xf32, #tpu.memory_space<vmem>>, vector<32x128xf32>,
    } else {
    }
    return
  }
  func.func @transform_0(%arg0: i32, %arg1: i32, %arg2: memref<6xi32, #tpu.memory_space<smem>>) -> (i32, i32) {
    %c2_i32 = arith.constant 2 : i32
    %0 = arith.muli %c2_i32, %arg0 : i32
    %1 = arith.index_cast %0 : i32 to index
    %2 = memref.load %arg2[%1] : memref<6xi32, #tpu.memory_space<smem>>
    %3 = arith.addi %2, %arg1 : i32
    %c2_i32_0 = arith.constant 2 : i32
    %4 = arith.minsi %3, %c2_i32_0 : i32
    %c0_i32 = arith.constant 0 : i32
    %c0_i32_1 = arith.constant 0 : i32
    return %c0_i32, %4 : i32, i32
  }
  func.func @transform_1(%arg0: i32, %arg1: i32, %arg2: memref<6xi32, #tpu.memory_space<smem>>) -> (i32, i32) {
    %c2_i32 = arith.constant 2 : i32
    %0 = arith.muli %c2_i32, %arg0 : i32
    %1 = arith.index_cast %0 : i32 to index
    %2 = memref.load %arg2[%1] : memref<6xi32, #tpu.memory_space<smem>>
    %3 = arith.addi %2, %arg1 : i32
    %c2_i32_0 = arith.constant 2 : i32
    %4 = arith.minsi %3, %c2_i32_0 : i32
    %c0_i32 = arith.constant 0 : i32
    %c0_i32_1 = arith.constant 0 : i32
    return %4, %c0_i32 : i32, i32
  }
  func.func @transform_2(%arg0: i32, %arg1: i32, %arg2: memref<6xi32, #tpu.memory_space<smem>>) -> (i32, i32) {
    %c0_i32 = arith.constant 0 : i32
    %c0_i32_0 = arith.constant 0 : i32
    return %arg0, %c0_i32 : i32, i32
  }
  func.func @transform_3(%arg0: i32, %arg1: i32, %arg2: memref<6xi32, #tpu.memory_space<smem>>) -> (i32, i32) {
    %c0_i32 = arith.constant 0 : i32
    %c0_i32_0 = arith.constant 0 : i32
    %c0_i32_1 = arith.constant 0 : i32
    return %c0_i32, %c0_i32_0 : i32, i32
  }
  func.func @transform_4(%arg0: i32, %arg1: i32, %arg2: memref<6xi32, #tpu.memory_space<smem>>) -> (i32, i32) {
    %c0_i32 = arith.constant 0 : i32
    %c0_i32_0 = arith.constant 0 : i32
    %c0_i32_1 = arith.constant 0 : i32
    return %c0_i32, %c0_i32_0 : i32, i32
  }
  func.func @transform_5(%arg0: i32, %arg1: i32, %arg2: memref<6xi32, #tpu.memory_space<smem>>) -> (i32, i32) {
    %c0_i32 = arith.constant 0 : i32
    %c0_i32_0 = arith.constant 0 : i32
    %c0_i32_1 = arith.constant 0 : i32
    return %c0_i32, %c0_i32_0 : i32, i32
  }
  func.func @transform_6(%arg0: i32, %arg1: i32, %arg2: memref<6xi32, #tpu.memory_space<smem>>) -> (i32, i32) {
    %c0_i32 = arith.constant 0 : i32
    %c0_i32_0 = arith.constant 0 : i32
    %c0_i32_1 = arith.constant 0 : i32
    return %c0_i32, %c0_i32_0 : i32, i32
  }
  func.func @transform_7(%arg0: i32, %arg1: i32, %arg2: memref<6xi32, #tpu.memory_space<smem>>) -> (i32, i32) {
    %c0_i32 = arith.constant 0 : i32
    %c0_i32_0 = arith.constant 0 : i32
    %c0_i32_1 = arith.constant 0 : i32
    return %c0_i32, %c0_i32_0 : i32, i32
  }
  func.func @transform_8(%arg0: i32, %arg1: i32, %arg2: memref<6xi32, #tpu.memory_space<smem>>) -> (i32, i32) {
    %c0_i32 = arith.constant 0 : i32
    %c0_i32_0 = arith.constant 0 : i32
    %c0_i32_1 = arith.constant 0 : i32
    return %c0_i32, %c0_i32_0 : i32, i32
  }
  func.func @transform_9(%arg0: i32, %arg1: i32, %arg2: memref<6xi32, #tpu.memory_space<smem>>) -> (i32, i32) {
    %c0_i32 = arith.constant 0 : i32
    %c0_i32_0 = arith.constant 0 : i32
    %c0_i32_1 = arith.constant 0 : i32
    return %c0_i32, %c0_i32_0 : i32, i32
  }
  func.func @transform_10(%arg0: i32, %arg1: i32, %arg2: memref<6xi32, #tpu.memory_space<smem>>) -> (i32, i32) {
    %c0_i32 = arith.constant 0 : i32
    %c0_i32_0 = arith.constant 0 : i32
    %c0_i32_1 = arith.constant 0 : i32
    return %c0_i32, %c0_i32_0 : i32, i32
  }
  func.func @transform_11(%arg0: i32, %arg1: i32, %arg2: memref<6xi32, #tpu.memory_space<smem>>) -> (i32, i32) {
    %c0_i32 = arith.constant 0 : i32
    %c0_i32_0 = arith.constant 0 : i32
    %c0_i32_1 = arith.constant 0 : i32
    return %c0_i32, %c0_i32_0 : i32, i32
  }
  func.func @transform_12(%arg0: i32, %arg1: i32, %arg2: memref<6xi32, #tpu.memory_space<smem>>) -> (i32, i32) {
    %c0_i32 = arith.constant 0 : i32
    %c0_i32_0 = arith.constant 0 : i32
    %c0_i32_1 = arith.constant 0 : i32
    return %c0_i32, %c0_i32_0 : i32, i32
  }
  func.func @transform_13(%arg0: i32, %arg1: i32, %arg2: memref<6xi32, #tpu.memory_space<smem>>) -> (i32, i32) {
    %c0_i32 = arith.constant 0 : i32
    %c0_i32_0 = arith.constant 0 : i32
    %c0_i32_1 = arith.constant 0 : i32
    return %c0_i32, %c0_i32_0 : i32, i32
  }
  func.func @transform_14(%arg0: i32, %arg1: i32, %arg2: memref<6xi32, #tpu.memory_space<smem>>) -> (i32, i32) {
    %c0_i32 = arith.constant 0 : i32
    %c0_i32_0 = arith.constant 0 : i32
    %c0_i32_1 = arith.constant 0 : i32
    return %c0_i32, %c0_i32_0 : i32, i32
  }
  func.func @transform_15(%arg0: i32, %arg1: i32, %arg2: memref<6xi32, #tpu.memory_space<smem>>) -> (i32, i32) {
    %c0_i32 = arith.constant 0 : i32
    %c0_i32_0 = arith.constant 0 : i32
    return %arg0, %c0_i32 : i32, i32
  }
}

</mosaic_0001>

<llo_original>
// kernel: tpu_custom_call.1
$region0: #{tpu_custom_call.1}
  #allocation0 [shape = 'u32[]', space=smem, size = 0x4, offset = 0x4, fixed_abs, tag = 'smem constant byte address 0x4 - core index']
  #allocation1 [shape = 'u32[72,128]{1,0:T(1,128)}', space=vmem, size = 0x9000, scoped, tag = 'internal scratch']
  #allocation2 [shape = 'f32[32,8]{1,0:T(8,128)}', space=vmem, size = 0x4000, scoped, tag = 'scratch operand']
  #allocation3 [shape = 's32[1]{0}', space=sflag, size = 0x4, scoped, tag = 'scoped memory for tpu_custom_call.1']
  #allocation4 [shape = 'u8[512]{0}', space=smem, size = 0x200, scoped, tag = 'prefetched SMEM operand 0']
  %s0 = inlined_call_operand.vmem [shape: s32[6], index: 0, kind: input, shape index: {}]
  %s1 = inlined_call_operand.vmem [shape: s32[1,384], index: 1, kind: input, shape index: {}]
  %s2 = inlined_call_operand.vmem [shape: bf16[384,8], index: 2, kind: input, shape index: {}]
  %s3 = inlined_call_operand.vmem [shape: bf16[96,8], index: 3, kind: input, shape index: {}]
  %s4 = inlined_call_operand.vmem [shape: bf16[16,32], index: 4, kind: input, shape index: {}]
  %s5 = inlined_call_operand.vmem [shape: f32[1,32], index: 5, kind: input, shape index: {}]
  %s6 = inlined_call_operand.vmem [shape: bf16[32,32], index: 6, kind: input, shape index: {}]
  %s7 = inlined_call_operand.vmem [shape: f32[1,32], index: 7, kind: input, shape index: {}]
  %s8 = inlined_call_operand.vmem [shape: bf16[40,32], index: 8, kind: input, shape index: {}]
  %s9 = inlined_call_operand.vmem [shape: f32[1,32], index: 9, kind: input, shape index: {}]
  %s10 = inlined_call_operand.vmem [shape: bf16[32,32], index: 10, kind: input, shape index: {}]
  %s11 = inlined_call_operand.vmem [shape: f32[1,32], index: 11, kind: input, shape index: {}]
  %s12 = inlined_call_operand.vmem [shape: bf16[40,32], index: 12, kind: input, shape index: {}]
  %s13 = inlined_call_operand.vmem [shape: f32[1,32], index: 13, kind: input, shape index: {}]
  %s14 = inlined_call_operand.vmem [shape: bf16[32,128], index: 14, kind: input, shape index: {}]
  %s15 = inlined_call_operand.vmem [shape: f32[1,128], index: 15, kind: input, shape index: {}]
  %s16 = inlined_call_operand.hbm [shape: f32[96,128], index: 16, kind: output, shape index: {}]
  %s17 = sld [smem:[#allocation0]]
  $region105: #{tpu_custom_call.1} parent=0
    _
  %s19 = ssub.s32 1, %s17
  %s20 = scalar_select 0, %s19, %s17
  %s22 = sshll.u32 %s0, 4
  %s23 = int_to_ptr.vmem [resolvable:$true] %s22
  %25 = dma.vmem_to_smem %s23, 16, [#allocation4], [#allocation3]
  %27 = dma.done [#allocation3], 16
  %28 = sfence
  $region1: #{tpu_custom_call.1} parent=0
    #allocation5 [shape = 'u8[32768]{0}', space=vmem, size = 0x8000, scoped, tag = 'output window, operand 0']
    #allocation6 [shape = 's32[2]{0}', space=sflag, size = 0x8, scoped, tag = 'scoped memory for tpu_custom_call.1']
    %29 = vsyncpa [#allocation6], 0
    %s30 = scalar_lea.sflag [#allocation6], 1
    %31 = vsyncpa %s30, 0
    loop: start=0, step=1, limit=8
    $region2: #{tpu_custom_call.1} parent=1 // loop_pre_header
      _
    $region3: #{tpu_custom_call.1} parent=1 // loop_header
      %s33 = sphi 0, %s37
      %p34 = scmp.ge.s32.totalorder %s33, 8
      %s40 = sphi 0, %s52
      %s41 = sphi 0, %s48
      %s42 = sphi 0, %s40
      %s43 = sphi 0, %s41
      %s44 = sphi 0, %s42
      %s45 = sphi 0, %s43
      %s65 = sphi 0, %s67
      %s68 = sphi 0, %s65
      %s69 = sphi 0, %s68
      %s85 = sphi 0, %s69
      %s101 = sphi 0, %s103
      %s104 = sphi 0, %s101
      %s105 = sphi 0, %s104
      %s121 = sphi 0, %s105
      %s127 = sphi 0, %s129
      %s130 = sphi 0, %s127
      %s131 = sphi 0, %s130
      %s147 = sphi 0, %s131
      %s151 = sphi 0, %s151
      %s153 = sphi 0, %s151
      %s154 = sphi 0, %s153
      %s168 = sphi 0, %s154
      %s172 = sphi 0, %s172
      %s174 = sphi 0, %s172
      %s175 = sphi 0, %s174
      %s189 = sphi 0, %s175
      %s193 = sphi 0, %s193
      %s195 = sphi 0, %s193
      %s196 = sphi 0, %s195
      %s210 = sphi 0, %s196
      %s214 = sphi 0, %s214
      %s216 = sphi 0, %s214
      %s217 = sphi 0, %s216
      %s231 = sphi 0, %s217
      %s235 = sphi 0, %s235
      %s237 = sphi 0, %s235
      %s238 = sphi 0, %s237
      %s252 = sphi 0, %s238
      %s256 = sphi 0, %s256
      %s258 = sphi 0, %s256
      %s259 = sphi 0, %s258
      %s273 = sphi 0, %s259
      %s277 = sphi 0, %s277
      %s279 = sphi 0, %s277
      %s280 = sphi 0, %s279
      %s294 = sphi 0, %s280
      %s298 = sphi 0, %s298
      %s300 = sphi 0, %s298
      %s301 = sphi 0, %s300
      %s315 = sphi 0, %s301
      %s319 = sphi 0, %s319
      %s321 = sphi 0, %s319
      %s322 = sphi 0, %s321
      %s336 = sphi 0, %s322
      %s340 = sphi 0, %s340
      %s342 = sphi 0, %s340
      %s343 = sphi 0, %s342
      %s357 = sphi 0, %s343
      %s361 = sphi 0, %s361
      %s363 = sphi 0, %s361
      %s364 = sphi 0, %s363
      %s378 = sphi 0, %s364
      %s382 = sphi 0, %s382
      %s384 = sphi 0, %s382
      %s385 = sphi 0, %s384
      %s399 = sphi 0, %s385
      %s405 = sphi 0, %s407
      %s408 = sphi 0, %s405
      %s409 = sphi 0, %s408
      %s425 = sphi 0, %s409
    $region4: #{tpu_custom_call.1} parent=1 // loop_header_branch
      %36 = sbr.rel (%p34) target = $region8
    $region5: #{tpu_custom_call.1} parent=1 // loop_body
      %s38 = ssub.s32 %s33, 1
      %s39 = ssub.s32 %s33, 2
      %s46 = sadd.s32 1, %s41
      %p47 = scmp.ge.s32.totalorder %s46, 2
      %s48 = scalar_select %p47, 0, %s46
      %s49 = sadd.s32 1, %s40
      %s50 = scalar_select %p47, %s49, %s40
      %p51 = scmp.ge.s32.totalorder %s50, 3
      %s52 = scalar_select %p51, 0, %s50
      %s53 = smul.u32 %s40, 2
      %s54 = sld [smem:[#allocation4 + %s53]]
      %s55 = sadd.s32 %s54, %s41
      %p56 = scmp.lt.s32.totalorder %s55, 2
      %s57 = scalar_select %p56, %s55, 2
      %s58 = smul.u32 %s52, 2
      %s59 = sld [smem:[#allocation4 + %s58]]
      %s60 = sadd.s32 %s59, %s48
      %p61 = scmp.lt.s32.totalorder %s60, 2
      %s62 = scalar_select %p61, %s60, 2
      %s63 = ssub.s32 %s57, %s62
      %p64 = scmp.eq.s32.totalorder %s63, 0
      %s66 = sadd.s32 %s65, 1
      %s67 = scalar_select %p64, %s65, %s66
      %p70 = pneg %p64
      %p71 = scmp.eq.s32.totalorder %s33, 5
      %p72 = por %p70, %p71
      %p73 = scmp.ne.s32.totalorder %s65, %s68
      %p74 = scmp.eq.s32.totalorder %s33, 0
      %p75 = por %p73, %p74
      %p76 = scmp.ne.s32.totalorder %s65, %s68
      %p77 = scmp.eq.s32.totalorder %s38, 5
      %p78 = por %p76, %p77
      %p79 = scmp.ne.s32.totalorder %s68, %s69
      %p80 = scmp.eq.s32.totalorder %s38, 0
      %p81 = por %p79, %p80
      %p82 = scmp.ne.s32.totalorder %s68, %s69
      %p83 = scmp.eq.s32.totalorder %s39, 5
      %p84 = por %p82, %p83
      %p86 = scmp.ne.s32.totalorder %s69, %s85
      %p87 = scmp.eq.s32.totalorder %s39, 0
      %p88 = por %p86, %p87
      %s89 = smul.u32 %s40, 2
      %s90 = sld [smem:[#allocation4 + %s89]]
      %s91 = sadd.s32 %s90, %s41
      %p92 = scmp.lt.s32.totalorder %s91, 2
      %s93 = scalar_select %p92, %s91, 2
      %s94 = smul.u32 %s52, 2
      %s95 = sld [smem:[#allocation4 + %s94]]
      %s96 = sadd.s32 %s95, %s48
      %p97 = scmp.lt.s32.totalorder %s96, 2
      %s98 = scalar_select %p97, %s96, 2
      %s99 = ssub.s32 %s93, %s98
      %p100 = scmp.eq.s32.totalorder %s99, 0
      %s102 = sadd.s32 %s101, 1
      %s103 = scalar_select %p100, %s101, %s102
      %p106 = pneg %p100
      %p107 = scmp.eq.s32.totalorder %s33, 5
      %p108 = por %p106, %p107
      %p109 = scmp.ne.s32.totalorder %s101, %s104
      %p110 = scmp.eq.s32.totalorder %s33, 0
      %p111 = por %p109, %p110
      %p112 = scmp.ne.s32.totalorder %s101, %s104
      %p113 = scmp.eq.s32.totalorder %s38, 5
      %p114 = por %p112, %p113
      %p115 = scmp.ne.s32.totalorder %s104, %s105
      %p116 = scmp.eq.s32.totalorder %s38, 0
      %p117 = por %p115, %p116
      %p118 = scmp.ne.s32.totalorder %s104, %s105
      %p119 = scmp.eq.s32.totalorder %s39, 5
      %p120 = por %p118, %p119
      %p122 = scmp.ne.s32.totalorder %s105, %s121
      %p123 = scmp.eq.s32.totalorder %s39, 0
      %p124 = por %p122, %p123
      %s125 = ssub.s32 %s40, %s52
      %p126 = scmp.eq.s32.totalorder %s125, 0
      %s128 = sadd.s32 %s127, 1
      %s129 = scalar_select %p126, %s127, %s128
      %p132 = pneg %p126
      %p133 = scmp.eq.s32.totalorder %s33, 5
      %p134 = por %p132, %p133
      %p135 = scmp.ne.s32.totalorder %s127, %s130
      %p136 = scmp.eq.s32.totalorder %s33, 0
      %p137 = por %p135, %p136
      %p138 = scmp.ne.s32.totalorder %s127, %s130
      %p139 = scmp.eq.s32.totalorder %s38, 5
      %p140 = por %p138, %p139
      %p141 = scmp.ne.s32.totalorder %s130, %s131
      %p142 = scmp.eq.s32.totalorder %s38, 0
      %p143 = por %p141, %p142
      %p144 = scmp.ne.s32.totalorder %s130, %s131
      %p145 = scmp.eq.s32.totalorder %s39, 5
      %p146 = por %p144, %p145
      %p148 = scmp.ne.s32.totalorder %s131, %s147
      %p149 = scmp.eq.s32.totalorder %s39, 0
      %p150 = por %p148, %p149
      %s152 = sadd.s32 %s151, 1
      %p155 = scmp.eq.s32.totalorder %s33, 5
      %p156 = scmp.ne.s32.totalorder %s151, %s153
      %p157 = scmp.eq.s32.totalorder %s33, 0
      %p158 = por %p156, %p157
      %p159 = scmp.ne.s32.totalorder %s151, %s153
      %p160 = scmp.eq.s32.totalorder %s38, 5
      %p161 = por %p159, %p160
      %p162 = scmp.ne.s32.totalorder %s153, %s154
      %p163 = scmp.eq.s32.totalorder %s38, 0
      %p164 = por %p162, %p163
      %p165 = scmp.ne.s32.totalorder %s153, %s154
      %p166 = scmp.eq.s32.totalorder %s39, 5
      %p167 = por %p165, %p166
      %p169 = scmp.ne.s32.totalorder %s154, %s168
      %p170 = scmp.eq.s32.totalorder %s39, 0
      %p171 = por %p169, %p170
      %s173 = sadd.s32 %s172, 1
      %p176 = scmp.eq.s32.totalorder %s33, 5
      %p177 = scmp.ne.s32.totalorder %s172, %s174
      %p178 = scmp.eq.s32.totalorder %s33, 0
      %p179 = por %p177, %p178
      %p180 = scmp.ne.s32.totalorder %s172, %s174
      %p181 = scmp.eq.s32.totalorder %s38, 5
      %p182 = por %p180, %p181
      %p183 = scmp.ne.s32.totalorder %s174, %s175
      %p184 = scmp.eq.s32.totalorder %s38, 0
      %p185 = por %p183, %p184
      %p186 = scmp.ne.s32.totalorder %s174, %s175
      %p187 = scmp.eq.s32.totalorder %s39, 5
      %p188 = por %p186, %p187
      %p190 = scmp.ne.s32.totalorder %s175, %s189
      %p191 = scmp.eq.s32.totalorder %s39, 0
      %p192 = por %p190, %p191
      %s194 = sadd.s32 %s193, 1
      %p197 = scmp.eq.s32.totalorder %s33, 5
      %p198 = scmp.ne.s32.totalorder %s193, %s195
      %p199 = scmp.eq.s32.totalorder %s33, 0
      %p200 = por %p198, %p199
      %p201 = scmp.ne.s32.totalorder %s193, %s195
      %p202 = scmp.eq.s32.totalorder %s38, 5
      %p203 = por %p201, %p202
      %p204 = scmp.ne.s32.totalorder %s195, %s196
      %p205 = scmp.eq.s32.totalorder %s38, 0
      %p206 = por %p204, %p205
      %p207 = scmp.ne.s32.totalorder %s195, %s196
      %p208 = scmp.eq.s32.totalorder %s39, 5
      %p209 = por %p207, %p208
      %p211 = scmp.ne.s32.totalorder %s196, %s210
      %p212 = scmp.eq.s32.totalorder %s39, 0
      %p213 = por %p211, %p212
      %s215 = sadd.s32 %s214, 1
      %p218 = scmp.eq.s32.totalorder %s33, 5
      %p219 = scmp.ne.s32.totalorder %s214, %s216
      %p220 = scmp.eq.s32.totalorder %s33, 0
      %p221 = por %p219, %p220
      %p222 = scmp.ne.s32.totalorder %s214, %s216
      %p223 = scmp.eq.s32.totalorder %s38, 5
      %p224 = por %p222, %p223
      %p225 = scmp.ne.s32.totalorder %s216, %s217
      %p226 = scmp.eq.s32.totalorder %s38, 0
      %p227 = por %p225, %p226
      %p228 = scmp.ne.s32.totalorder %s216, %s217
      %p229 = scmp.eq.s32.totalorder %s39, 5
      %p230 = por %p228, %p229
      %p232 = scmp.ne.s32.totalorder %s217, %s231
      %p233 = scmp.eq.s32.totalorder %s39, 0
      %p234 = por %p232, %p233
      %s236 = sadd.s32 %s235, 1
      %p239 = scmp.eq.s32.totalorder %s33, 5
      %p240 = scmp.ne.s32.totalorder %s235, %s237
      %p241 = scmp.eq.s32.totalorder %s33, 0
      %p242 = por %p240, %p241
      %p243 = scmp.ne.s32.totalorder %s235, %s237
      %p244 = scmp.eq.s32.totalorder %s38, 5
      %p245 = por %p243, %p244
      %p246 = scmp.ne.s32.totalorder %s237, %s238
      %p247 = scmp.eq.s32.totalorder %s38, 0
      %p248 = por %p246, %p247
      %p249 = scmp.ne.s32.totalorder %s237, %s238
      %p250 = scmp.eq.s32.totalorder %s39, 5
      %p251 = por %p249, %p250
      %p253 = scmp.ne.s32.totalorder %s238, %s252
      %p254 = scmp.eq.s32.totalorder %s39, 0
      %p255 = por %p253, %p254
      %s257 = sadd.s32 %s256, 1
      %p260 = scmp.eq.s32.totalorder %s33, 5
      %p261 = scmp.ne.s32.totalorder %s256, %s258
      %p262 = scmp.eq.s32.totalorder %s33, 0
      %p263 = por %p261, %p262
      %p264 = scmp.ne.s32.totalorder %s256, %s258
      %p265 = scmp.eq.s32.totalorder %s38, 5
      %p266 = por %p264, %p265
      %p267 = scmp.ne.s32.totalorder %s258, %s259
      %p268 = scmp.eq.s32.totalorder %s38, 0
      %p269 = por %p267, %p268
      %p270 = scmp.ne.s32.totalorder %s258, %s259
      %p271 = scmp.eq.s32.totalorder %s39, 5
      %p272 = por %p270, %p271
      %p274 = scmp.ne.s32.totalorder %s259, %s273
      %p275 = scmp.eq.s32.totalorder %s39, 0
      %p276 = por %p274, %p275
      %s278 = sadd.s32 %s277, 1
      %p281 = scmp.eq.s32.totalorder %s33, 5
      %p282 = scmp.ne.s32.totalorder %s277, %s279
      %p283 = scmp.eq.s32.totalorder %s33, 0
      %p284 = por %p282, %p283
      %p285 = scmp.ne.s32.totalorder %s277, %s279
      %p286 = scmp.eq.s32.totalorder %s38, 5
      %p287 = por %p285, %p286
      %p288 = scmp.ne.s32.totalorder %s279, %s280
      %p289 = scmp.eq.s32.totalorder %s38, 0
      %p290 = por %p288, %p289
      %p291 = scmp.ne.s32.totalorder %s279, %s280
      %p292 = scmp.eq.s32.totalorder %s39, 5
      %p293 = por %p291, %p292
      %p295 = scmp.ne.s32.totalorder %s280, %s294
      %p296 = scmp.eq.s32.totalorder %s39, 0
      %p297 = por %p295, %p296
      %s299 = sadd.s32 %s298, 1
      %p302 = scmp.eq.s32.totalorder %s33, 5
      %p303 = scmp.ne.s32.totalorder %s298, %s300
      %p304 = scmp.eq.s32.totalorder %s33, 0
      %p305 = por %p303, %p304
      %p306 = scmp.ne.s32.totalorder %s298, %s300
      %p307 = scmp.eq.s32.totalorder %s38, 5
      %p308 = por %p306, %p307
      %p309 = scmp.ne.s32.totalorder %s300, %s301
      %p310 = scmp.eq.s32.totalorder %s38, 0
      %p311 = por %p309, %p310
      %p312 = scmp.ne.s32.totalorder %s300, %s301
      %p313 = scmp.eq.s32.totalorder %s39, 5
      %p314 = por %p312, %p313
      %p316 = scmp.ne.s32.totalorder %s301, %s315
      %p317 = scmp.eq.s32.totalorder %s39, 0
      %p318 = por %p316, %p317
      %s320 = sadd.s32 %s319, 1
      %p323 = scmp.eq.s32.totalorder %s33, 5
      %p324 = scmp.ne.s32.totalorder %s319, %s321
      %p325 = scmp.eq.s32.totalorder %s33, 0
      %p326 = por %p324, %p325
      %p327 = scmp.ne.s32.totalorder %s319, %s321
      %p328 = scmp.eq.s32.totalorder %s38, 5
      %p329 = por %p327, %p328
      %p330 = scmp.ne.s32.totalorder %s321, %s322
      %p331 = scmp.eq.s32.totalorder %s38, 0
      %p332 = por %p330, %p331
      %p333 = scmp.ne.s32.totalorder %s321, %s322
      %p334 = scmp.eq.s32.totalorder %s39, 5
      %p335 = por %p333, %p334
      %p337 = scmp.ne.s32.totalorder %s322, %s336
      %p338 = scmp.eq.s32.totalorder %s39, 0
      %p339 = por %p337, %p338
      %s341 = sadd.s32 %s340, 1
      %p344 = scmp.eq.s32.totalorder %s33, 5
      %p345 = scmp.ne.s32.totalorder %s340, %s342
      %p346 = scmp.eq.s32.totalorder %s33, 0
      %p347 = por %p345, %p346
      %p348 = scmp.ne.s32.totalorder %s340, %s342
      %p349 = scmp.eq.s32.totalorder %s38, 5
      %p350 = por %p348, %p349
      %p351 = scmp.ne.s32.totalorder %s342, %s343
      %p352 = scmp.eq.s32.totalorder %s38, 0
      %p353 = por %p351, %p352
      %p354 = scmp.ne.s32.totalorder %s342, %s343
      %p355 = scmp.eq.s32.totalorder %s39, 5
      %p356 = por %p354, %p355
      %p358 = scmp.ne.s32.totalorder %s343, %s357
      %p359 = scmp.eq.s32.totalorder %s39, 0
      %p360 = por %p358, %p359
      %s362 = sadd.s32 %s361, 1
      %p365 = scmp.eq.s32.totalorder %s33, 5
      %p366 = scmp.ne.s32.totalorder %s361, %s363
      %p367 = scmp.eq.s32.totalorder %s33, 0
      %p368 = por %p366, %p367
      %p369 = scmp.ne.s32.totalorder %s361, %s363
      %p370 = scmp.eq.s32.totalorder %s38, 5
      %p371 = por %p369, %p370
      %p372 = scmp.ne.s32.totalorder %s363, %s364
      %p373 = scmp.eq.s32.totalorder %s38, 0
      %p374 = por %p372, %p373
      %p375 = scmp.ne.s32.totalorder %s363, %s364
      %p376 = scmp.eq.s32.totalorder %s39, 5
      %p377 = por %p375, %p376
      %p379 = scmp.ne.s32.totalorder %s364, %s378
      %p380 = scmp.eq.s32.totalorder %s39, 0
      %p381 = por %p379, %p380
      %s383 = sadd.s32 %s382, 1
      %p386 = scmp.eq.s32.totalorder %s33, 5
      %p387 = scmp.ne.s32.totalorder %s382, %s384
      %p388 = scmp.eq.s32.totalorder %s33, 0
      %p389 = por %p387, %p388
      %p390 = scmp.ne.s32.totalorder %s382, %s384
      %p391 = scmp.eq.s32.totalorder %s38, 5
      %p392 = por %p390, %p391
      %p393 = scmp.ne.s32.totalorder %s384, %s385
      %p394 = scmp.eq.s32.totalorder %s38, 0
      %p395 = por %p393, %p394
      %p396 = scmp.ne.s32.totalorder %s384, %s385
      %p397 = scmp.eq.s32.totalorder %s39, 5
      %p398 = por %p396, %p397
      %p400 = scmp.ne.s32.totalorder %s385, %s399
      %p401 = scmp.eq.s32.totalorder %s39, 0
      %p402 = por %p400, %p401
      %s403 = ssub.s32 %s40, %s52
      %p404 = scmp.eq.s32.totalorder %s403, 0
      %s406 = sadd.s32 %s405, 1
      %s407 = scalar_select %p404, %s405, %s406
      %p410 = pneg %p404
      %p411 = scmp.eq.s32.totalorder %s33, 5
      %p412 = por %p410, %p411
      %p413 = scmp.ne.s32.totalorder %s405, %s408
      %p414 = scmp.eq.s32.totalorder %s33, 0
      %p415 = por %p413, %p414
      %p416 = scmp.ne.s32.totalorder %s405, %s408
      %p417 = scmp.eq.s32.totalorder %s38, 5
      %p418 = por %p416, %p417
      %p419 = scmp.ne.s32.totalorder %s408, %s409
      %p420 = scmp.eq.s32.totalorder %s38, 0
      %p421 = por %p419, %p420
      %p422 = scmp.ne.s32.totalorder %s408, %s409
      %p423 = scmp.eq.s32.totalorder %s39, 5
      %p424 = por %p422, %p423
      %p426 = scmp.ne.s32.totalorder %s409, %s425
      %p427 = scmp.eq.s32.totalorder %s39, 0
      %p428 = por %p426, %p427
      %p429 = scmp.le.s32.totalorder 1, %s33
      %p430 = scmp.lt.s32.totalorder %s33, 7
      %p431 = pnand %p429, %p430
      %p432 = pneg %p431
      // Predicated region
      $region9: #{tpu_custom_call.1} parent=5 // pred_check
        _
      $region10: #{tpu_custom_call.1} parent=5 // pred_check_branch
        %434 = sbr.rel (%p431) target = $region12
      $region11: #{tpu_custom_call.1} parent=5 // pred_region
        %s435 = ssub.s32 %s33, 1
        // Predicated region
        $region13: #{tpu_custom_call.1} parent=11 // pred_check
          %p436 = pneg %p164
        $region14: #{tpu_custom_call.1} parent=11 // pred_check_branch
          %438 = sbr.rel (%p436) target = $region16
        $region15: #{tpu_custom_call.1} parent=11 // pred_region
          _
        $region16: #{tpu_custom_call.1} parent=11 // pred_fallthru
          _
        // Predicated region
        $region17: #{tpu_custom_call.1} parent=11 // pred_check
          %p439 = pneg %p185
        $region18: #{tpu_custom_call.1} parent=11 // pred_check_branch
          %441 = sbr.rel (%p439) target = $region20
        $region19: #{tpu_custom_call.1} parent=11 // pred_region
          _
        $region20: #{tpu_custom_call.1} parent=11 // pred_fallthru
          _
        // Predicated region
        $region21: #{tpu_custom_call.1} parent=11 // pred_check
          %p442 = pneg %p206
        $region22: #{tpu_custom_call.1} parent=11 // pred_check_branch
          %444 = sbr.rel (%p442) target = $region24
        $region23: #{tpu_custom_call.1} parent=11 // pred_region
          _
        $region24: #{tpu_custom_call.1} parent=11 // pred_fallthru
          _
        // Predicated region
        $region25: #{tpu_custom_call.1} parent=11 // pred_check
          %p445 = pneg %p227
        $region26: #{tpu_custom_call.1} parent=11 // pred_check_branch
          %447 = sbr.rel (%p445) target = $region28
        $region27: #{tpu_custom_call.1} parent=11 // pred_region
          _
        $region28: #{tpu_custom_call.1} parent=11 // pred_fallthru
          _
        // Predicated region
        $region29: #{tpu_custom_call.1} parent=11 // pred_check
          %p448 = pneg %p248
        $region30: #{tpu_custom_call.1} parent=11 // pred_check_branch
          %450 = sbr.rel (%p448) target = $region32
        $region31: #{tpu_custom_call.1} parent=11 // pred_region
          _
        $region32: #{tpu_custom_call.1} parent=11 // pred_fallthru
          _
        // Predicated region
        $region33: #{tpu_custom_call.1} parent=11 // pred_check
          %p451 = pneg %p269
        $region34: #{tpu_custom_call.1} parent=11 // pred_check_branch
          %453 = sbr.rel (%p451) target = $region36
        $region35: #{tpu_custom_call.1} parent=11 // pred_region
          _
        $region36: #{tpu_custom_call.1} parent=11 // pred_fallthru
          _
        // Predicated region
        $region37: #{tpu_custom_call.1} parent=11 // pred_check
          %p454 = pneg %p290
        $region38: #{tpu_custom_call.1} parent=11 // pred_check_branch
          %456 = sbr.rel (%p454) target = $region40
        $region39: #{tpu_custom_call.1} parent=11 // pred_region
          _
        $region40: #{tpu_custom_call.1} parent=11 // pred_fallthru
          _
        // Predicated region
        $region41: #{tpu_custom_call.1} parent=11 // pred_check
          %p457 = pneg %p311
        $region42: #{tpu_custom_call.1} parent=11 // pred_check_branch
          %459 = sbr.rel (%p457) target = $region44
        $region43: #{tpu_custom_call.1} parent=11 // pred_region
          _
        $region44: #{tpu_custom_call.1} parent=11 // pred_fallthru
          _
        // Predicated region
        $region45: #{tpu_custom_call.1} parent=11 // pred_check
          %p460 = pneg %p332
        $region46: #{tpu_custom_call.1} parent=11 // pred_check_branch
          %462 = sbr.rel (%p460) target = $region48
        $region47: #{tpu_custom_call.1} parent=11 // pred_region
          _
        $region48: #{tpu_custom_call.1} parent=11 // pred_fallthru
          _
        // Predicated region
        $region49: #{tpu_custom_call.1} parent=11 // pred_check
          %p463 = pneg %p353
        $region50: #{tpu_custom_call.1} parent=11 // pred_check_branch
          %465 = sbr.rel (%p463) target = $region52
        $region51: #{tpu_custom_call.1} parent=11 // pred_region
          _
        $region52: #{tpu_custom_call.1} parent=11 // pred_fallthru
          _
        // Predicated region
        $region53: #{tpu_custom_call.1} parent=11 // pred_check
          %p466 = pneg %p374
        $region54: #{tpu_custom_call.1} parent=11 // pred_check_branch
          %468 = sbr.rel (%p466) target = $region56
        $region55: #{tpu_custom_call.1} parent=11 // pred_region
          _
        $region56: #{tpu_custom_call.1} parent=11 // pred_fallthru
          _
        // Predicated region
        $region57: #{tpu_custom_call.1} parent=11 // pred_check
          %p469 = pneg %p395
        $region58: #{tpu_custom_call.1} parent=11 // pred_check_branch
          %471 = sbr.rel (%p469) target = $region60
        $region59: #{tpu_custom_call.1} parent=11 // pred_region
          _
        $region60: #{tpu_custom_call.1} parent=11 // pred_fallthru
          _
      $region12: #{tpu_custom_call.1} parent=5 // pred_fallthru
        _
      %p472 = scmp.lt.s32.totalorder %s33, 6
      // Predicated region
      $region61: #{tpu_custom_call.1} parent=5 // pred_check
        %p473 = pneg %p472
      $region62: #{tpu_custom_call.1} parent=5 // pred_check_branch
        %475 = sbr.rel (%p473) target = $region64
      $region63: #{tpu_custom_call.1} parent=5 // pred_region
        // Predicated region
        $region65: #{tpu_custom_call.1} parent=63 // pred_check
          %p476 = pneg %p75
        $region66: #{tpu_custom_call.1} parent=63 // pred_check_branch
          %478 = sbr.rel (%p476) target = $region68
        $region67: #{tpu_custom_call.1} parent=63 // pred_region
          %s479 = smul.u32 %s40, 2
          %s480 = sld [smem:[#allocation4 + %s479]]
          %s481 = sadd.s32 %s480, %s41
          %p482 = scmp.lt.s32.totalorder %s481, 2
          %s483 = scalar_select %p482, %s481, 2
          %p484 = scmp.lt.s32.totalorder %s483, 2
          %s485 = scalar_select %p484, %s483, 2
          %s486 = scalar_lea.vmem %s1, %s485
          %s487 = smul.u32 %s40, 2
          %s488 = sld [smem:[#allocation4 + %s487]]
          %s489 = sadd.s32 %s488, %s41
          %p490 = scmp.lt.s32.totalorder %s489, 2
          %s491 = scalar_select %p490, %s489, 2
        $region68: #{tpu_custom_call.1} parent=63 // pred_fallthru
          _
        // Predicated region
        $region69: #{tpu_custom_call.1} parent=63 // pred_check
          %p492 = pneg %p111
        $region70: #{tpu_custom_call.1} parent=63 // pred_check_branch
          %494 = sbr.rel (%p492) target = $region72
        $region71: #{tpu_custom_call.1} parent=63 // pred_region
          %s495 = smul.u32 %s40, 2
          %s496 = sld [smem:[#allocation4 + %s495]]
          %s497 = sadd.s32 %s496, %s41
          %p498 = scmp.lt.s32.totalorder %s497, 2
          %s499 = scalar_select %p498, %s497, 2
          %s500 = smul.u32 16, %s499
          %p501 = scmp.lt.s32.totalorder %s500, 47
          %s502 = scalar_select %p501, %s500, 47
          %s503 = smul.addr %s502, 4
          %s504 = scalar_lea.vmem %s2, %s503
          %s505 = smul.u32 %s40, 2
          %s506 = sld [smem:[#allocation4 + %s505]]
          %s507 = sadd.s32 %s506, %s41
          %p508 = scmp.lt.s32.totalorder %s507, 2
          %s509 = scalar_select %p508, %s507, 2
          %s510 = smul.u32 16, %s509
        $region72: #{tpu_custom_call.1} parent=63 // pred_fallthru
          _
        // Predicated region
        $region73: #{tpu_custom_call.1} parent=63 // pred_check
          %p511 = pneg %p137
        $region74: #{tpu_custom_call.1} parent=63 // pred_check_branch
          %513 = sbr.rel (%p511) target = $region76
        $region75: #{tpu_custom_call.1} parent=63 // pred_region
          %s514 = smul.u32 4, %s40
          %p515 = scmp.lt.s32.totalorder %s514, 11
          %s516 = scalar_select %p515, %s514, 11
          %s517 = smul.addr %s516, 4
          %s518 = scalar_lea.vmem %s3, %s517
          %s519 = smul.u32 4, %s40
        $region76: #{tpu_custom_call.1} parent=63 // pred_fallthru
          _
      $region64: #{tpu_custom_call.1} parent=5 // pred_fallthru
        _
      %p520 = scmp.le.s32.totalorder 1, %s33
      %p521 = scmp.lt.s32.totalorder %s33, 7
      %p522 = pnand %p520, %p521
      %p523 = pneg %p522
      // Predicated region
      $region77: #{tpu_custom_call.1} parent=5 // pred_check
        _
      $region78: #{tpu_custom_call.1} parent=5 // pred_check_branch
        %525 = sbr.rel (%p522) target = $region80
      $region79: #{tpu_custom_call.1} parent=5 // pred_region
        %s526 = ssub.s32 %s33, 1
        %s527 = smul.u32 %s42, 2
        %s528 = sld [smem:[#allocation4 + %s527]]
        %s529 = sadd.s32 %s528, %s43
        %p530 = scmp.lt.s32.totalorder %s529, 2
        %s531 = scalar_select %p530, %s529, 2
        %p532 = scmp.lt.s32.totalorder %s531, 2
        %s533 = scalar_select %p532, %s531, 2
        %s534 = scalar_lea.vmem %s1, %s533
        %p535 = pneg %p81
        %p536 = pneg %p78
        %s537 = smul.u32 %s42, 2
        %s538 = sld [smem:[#allocation4 + %s537]]
        %s539 = sadd.s32 %s538, %s43
        %p540 = scmp.lt.s32.totalorder %s539, 2
        %s541 = scalar_select %p540, %s539, 2
        %s542 = smul.u32 16, %s541
        %p543 = scmp.lt.s32.totalorder %s542, 47
        %s544 = scalar_select %p543, %s542, 47
        %s545 = smul.addr %s544, 4
        %s546 = scalar_lea.vmem %s2, %s545
        %p547 = pneg %p117
        %p548 = pneg %p114
        %s549 = smul.u32 4, %s42
        %p550 = scmp.lt.s32.totalorder %s549, 11
        %s551 = scalar_select %p550, %s549, 11
        %s552 = smul.addr %s551, 4
        %s553 = scalar_lea.vmem %s3, %s552
        %p554 = pneg %p143
        %p555 = pneg %p140
        %p556 = pneg %p164
        %p557 = pneg %p161
        %p558 = pneg %p185
        %p559 = pneg %p182
        %p560 = pneg %p206
        %p561 = pneg %p203
        %p562 = pneg %p227
        %p563 = pneg %p224
        %p564 = pneg %p248
        %p565 = pneg %p245
        %p566 = pneg %p269
        %p567 = pneg %p266
        %p568 = pneg %p290
        %p569 = pneg %p287
        %p570 = pneg %p311
        %p571 = pneg %p308
        %p572 = pneg %p332
        %p573 = pneg %p329
        %p574 = pneg %p353
        %p575 = pneg %p350
        %p576 = pneg %p374
        %p577 = pneg %p371
        %p578 = pneg %p395
        %p579 = pneg %p392
        %p580 = pneg %p421
        %p581 = pneg %p418
        %s582 = sand.u32 %s408, 1
        %s583 = scalar_lea.sflag [#allocation6], %s582
        %s584 = sand.u32 %s408, 1
        %s585 = smul.addr %s584, 32
        %s586 = scalar_lea.vmem [#allocation5], %s585
        %s587 = smul.u32 %s42, 2
        %s588 = sld [smem:[#allocation4 + %s587]]
        %s589 = sadd.s32 %s588, %s43
        %p590 = scmp.lt.s32.totalorder %s589, 2
        %s591 = scalar_select %p590, %s589, 2
        %p592 = scmp.lt.s32.totalorder %s591, 2
        %s593 = scalar_select %p592, %s591, 2
        %s594 = scalar_lea.vmem %s1, %s593
        %s595 = smul.u32 %s42, 2
        %s596 = sld [smem:[#allocation4 + %s595]]
        %s597 = sadd.s32 %s596, %s43
        %p598 = scmp.lt.s32.totalorder %s597, 2
        %s599 = scalar_select %p598, %s597, 2
        %s600 = smul.u32 %s42, 2
        %s601 = sld [smem:[#allocation4 + %s600]]
        %s602 = sadd.s32 %s601, %s43
        %p603 = scmp.lt.s32.totalorder %s602, 2
        %s604 = scalar_select %p603, %s602, 2
        %s605 = smul.u32 16, %s604
        %p606 = scmp.lt.s32.totalorder %s605, 47
        %s607 = scalar_select %p606, %s605, 47
        %s608 = smul.addr %s607, 4
        %s609 = scalar_lea.vmem %s2, %s608
        %s610 = smul.u32 %s42, 2
        %s611 = sld [smem:[#allocation4 + %s610]]
        %s612 = sadd.s32 %s611, %s43
        %p613 = scmp.lt.s32.totalorder %s612, 2
        %s614 = scalar_select %p613, %s612, 2
        %s615 = smul.u32 16, %s614
        %s616 = smul.u32 4, %s42
        %p617 = scmp.lt.s32.totalorder %s616, 11
        %s618 = scalar_select %p617, %s616, 11
        %s619 = smul.addr %s618, 4
        %s620 = scalar_lea.vmem %s3, %s619
        %s621 = smul.u32 4, %s42
        %s622 = smul.u32 4, %s42
        %p624 = scmp.eq.s32.totalorder %s43, 0
        // Predicated region
        $region81: #{tpu_custom_call.1} parent=79 // pred_check
          %p625 = pneg %p624
        $region82: #{tpu_custom_call.1} parent=79 // pred_check_branch
          %627 = sbr.rel (%p625) target = $region84
        $region83: #{tpu_custom_call.1} parent=79 // pred_region
          %vm628 = vcmask 64512
          %629 = vst.msk [vmem:[#allocation2] sm:$0xff] %vm628, 0.0
          %630 = vst.msk [vmem:[#allocation2 + $0x8] sm:$0xff] %vm628, 0.0
          %631 = vst.msk [vmem:[#allocation2 + $0x10] sm:$0xff] %vm628, 0.0
          %632 = vst.msk [vmem:[#allocation2 + $0x18] sm:$0xff] %vm628, 0.0
        $region84: #{tpu_custom_call.1} parent=79 // pred_fallthru
          _
        %s633 = smul.u32 %s42, 2
        %s634 = sadd.s32 %s633, 1
        %s635 = sld [smem:[#allocation4 + %s634]]
        %p636 = scmp.lt.s32.totalorder %s43, %s635
        // Predicated region
        $region85: #{tpu_custom_call.1} parent=79 // pred_check
          %p637 = pneg %p636
        $region86: #{tpu_custom_call.1} parent=79 // pred_check_branch
          %639 = sbr.rel (%p637) target = $region88
        $region87: #{tpu_custom_call.1} parent=79 // pred_region
          %s640 = smul.u32 %s42, 32
          %v641 = vlaneseq
          %v642 = vshrl.u32 %v641, 7
          %v643 = vadd.s32 %v642, 8
          %v644 = vadd.s32 %v642, 16
          %v645 = vadd.s32 %v642, 24
          %v646 = vstv %s640
          %v647 = vadd.s32 %v642, %v646
          %v648 = vadd.s32 %v643, %v646
          %v649 = vadd.s32 %v644, %v646
          %v650 = vadd.s32 %v645, %v646
          %v651 = vld [vmem:[%s594] sm:$0x1]
          %v652 = vperm.slane %v651, 0
          %vm653 = vcmp.eq.s32.totalorder %v647, %v652
          %vm654 = vcmp.eq.s32.totalorder %v648, %v652
          %vm655 = vcmp.eq.s32.totalorder %v649, %v652
          %vm656 = vcmp.eq.s32.totalorder %v650, %v652
          %v657 = vsel %vm653, 1, 0
          %v658 = vsel %vm654, 1, 0
          %v659 = vsel %vm655, 1, 0
          %v660 = vsel %vm656, 1, 0
          %v661 = vcvt.s32.f32 %v657
          %v662 = vcvt.s32.f32 %v658
          %v663 = vcvt.s32.f32 %v659
          %v664 = vcvt.s32.f32 %v660
          %v665 = vpack.c.bf16 %v662, %v661
          %v666 = vpack.c.bf16 %v664, %v663
          %v667 = vld [vmem:[#allocation2] sm:$0xff]
          %v668 = vld [vmem:[#allocation2 + $0x8] sm:$0xff]
          %v669 = vld [vmem:[#allocation2 + $0x10] sm:$0xff]
          %v670 = vld [vmem:[#allocation2 + $0x18] sm:$0xff]
          %v671 = vld [vmem:[%s609] sm:$0xf]
          %v672 = vld [vmem:[%s609 + $0x4] sm:$0xf]
          %v673 = vld [vmem:[%s609 + $0x8] sm:$0xf]
          %v674 = vld [vmem:[%s609 + $0xc] sm:$0xf]
          %v675 = vld [vmem:[%s609 + $0x10] sm:$0xf]
          %v676 = vld [vmem:[%s609 + $0x14] sm:$0xf]
          %v677 = vld [vmem:[%s609 + $0x18] sm:$0xf]
          %v678 = vld [vmem:[%s609 + $0x1c] sm:$0xf]
          %v679 = vld [vmem:[%s609 + $0x20] sm:$0xf]
          %v680 = vld [vmem:[%s609 + $0x24] sm:$0xf]
          %v681 = vld [vmem:[%s609 + $0x28] sm:$0xf]
          %v682 = vld [vmem:[%s609 + $0x2c] sm:$0xf]
          %v683 = vld [vmem:[%s609 + $0x30] sm:$0xf]
          %v684 = vld [vmem:[%s609 + $0x34] sm:$0xf]
          %v685 = vld [vmem:[%s609 + $0x38] sm:$0xf]
          %v686 = vld [vmem:[%s609 + $0x3c] sm:$0xf]
          %v703 = vunpack.c.l.b16 %v671
          %v704 = vunpack.c.l.b16 %v672
          %v705 = vunpack.c.l.b16 %v673
          %v706 = vunpack.c.l.b16 %v674
          %v707 = vunpack.c.l.b16 %v675
          %v708 = vunpack.c.l.b16 %v676
          %v709 = vunpack.c.l.b16 %v677
          %v710 = vunpack.c.l.b16 %v678
          %v711 = vunpack.c.l.b16 %v679
          %v712 = vunpack.c.l.b16 %v680
          %v713 = vunpack.c.l.b16 %v681
          %v714 = vunpack.c.l.b16 %v682
          %v715 = vunpack.c.l.b16 %v683
          %v716 = vunpack.c.l.b16 %v684
          %v717 = vunpack.c.l.b16 %v685
          %v718 = vunpack.c.l.b16 %v686
          %v719 = vpack.c.b16 %v704, %v703
          %v720 = vpack.c.b16 %v706, %v705
          %v721 = vpack.c.b16 %v708, %v707
          %v722 = vpack.c.b16 %v710, %v709
          %v723 = vpack.c.b16 %v712, %v711
          %v724 = vpack.c.b16 %v714, %v713
          %v725 = vpack.c.b16 %v716, %v715
          %v726 = vpack.c.b16 %v718, %v717
          %735 = vmatpush.bf16.msra.mxu0 %v726
          %736 = vmatpush.bf16.msra.mxu0 %v725
          %737 = vmatpush.bf16.msra.mxu0 %v724
          %738 = vmatpush.bf16.msra.mxu0 %v723
          %739 = vmatpush.bf16.msra.mxu0 %v722
          %740 = vmatpush.bf16.msra.mxu0 %v721
          %741 = vmatpush.bf16.msra.mxu0 %v720
          %742 = vmatpush.bf16.msra.mxu0 %v719
          %743 = vmatmul.bf16.gmra.mxu0 %v665
          %v744 = vpop.f32.mrf.mxu0
          %v745 = vadd.f32 0.0, %v744
          %v746 = vpop.f32.mrf.mxu0
          %v747 = vadd.f32 0.0, %v746
          %748 = vmatmul.bf16.gmra.mxu0 %v666
          %v749 = vpop.f32.mrf.mxu0
          %v750 = vadd.f32 0.0, %v749
          %v751 = vpop.f32.mrf.mxu0
          %v752 = vadd.f32 0.0, %v751
          %753 = vdwg.mxu0
          %v754 = vadd.f32 %v667, %v745
          %v755 = vadd.f32 %v668, %v747
          %v756 = vadd.f32 %v669, %v750
          %v757 = vadd.f32 %v670, %v752
          %vm758 = vcmask 64512
          %759 = vst.msk [vmem:[#allocation2] sm:$0xff] %vm758, %v754
          %760 = vst.msk [vmem:[#allocation2 + $0x8] sm:$0xff] %vm758, %v755
          %761 = vst.msk [vmem:[#allocation2 + $0x10] sm:$0xff] %vm758, %v756
          %762 = vst.msk [vmem:[#allocation2 + $0x18] sm:$0xff] %vm758, %v757
        $region88: #{tpu_custom_call.1} parent=79 // pred_fallthru
          _
        %p763 = scmp.eq.s32.totalorder %s43, 1
        // Predicated region
        $region89: #{tpu_custom_call.1} parent=79 // pred_check
          %p764 = pneg %p763
        $region90: #{tpu_custom_call.1} parent=79 // pred_check_branch
          %766 = sbr.rel (%p764) target = $region92
        $region91: #{tpu_custom_call.1} parent=79 // pred_region
          %v767 = vld [vmem:[#allocation2] sm:$0xff]
          %v768 = vld [vmem:[#allocation2 + $0x8] sm:$0xff]
          %v769 = vld [vmem:[#allocation2 + $0x10] sm:$0xff]
          %v770 = vld [vmem:[#allocation2 + $0x18] sm:$0xff]
          %v771 = vpack.c.bf16 %v767, %v767
          %v772 = vpack.c.bf16 %v768, %v768
          %v773 = vpack.c.bf16 %v769, %v769
          %v774 = vpack.c.bf16 %v770, %v770
          %v775 = vld [vmem:[%s620] sm:$0xf]
          %v776 = vld [vmem:[%s620 + $0x4] sm:$0xf]
          %v777 = vld [vmem:[%s620 + $0x8] sm:$0xf]
          %v778 = vld [vmem:[%s620 + $0xc] sm:$0xf]
          %v783 = vunpack.c.l.b16 %v775
          %v784 = vunpack.c.l.b16 %v776
          %v785 = vunpack.c.l.b16 %v777
          %v786 = vunpack.c.l.b16 %v778
          %v787 = vpack.c.b16 %v784, %v783
          %v788 = vpack.c.b16 %v786, %v785
          %v793 = vunpack.c.l.b16 %v771
          %v794 = vunpack.c.l.b16 %v772
          %v795 = vunpack.c.l.b16 %v773
          %v796 = vunpack.c.l.b16 %v774
          %v797 = vpack.c.b16 %v794, %v793
          %v798 = vpack.c.b16 %v796, %v795
          %799 = vrot.lane.b32.xlu0 %v797, 8
          %v800 = vpop.permute.xlu0 %799
          %801 = vrot.lane.b32.xlu0 %v798, 8
          %v802 = vpop.permute.xlu0 %801
          %vm803 = vcmask 64512
          %v806 = vsel %vm803, %v787, %v800
          %v809 = vsel %vm803, %v788, %v802
          %v810 = vld [vmem:[%s4] sm:$0xf]
          %v811 = vld [vmem:[%s4 + $0x4] sm:$0xf]
          %v812 = vld [vmem:[%s5] sm:$0x1]
          %v814 = vperm.slane %v812, 0
          %v818 = vunpack.c.l.b16 %v810
          %v819 = vunpack.c.l.b16 %v811
          %v820 = vpack.c.b16 %v819, %v818
          %vm822 = vcmask 130048
          %v823 = vsel %vm822, %v806, 0
          %v825 = vsel %vm822, %v809, 0
          %827 = vmatpush.bf16.msra.mxu0 0
          %828 = vmatpush.bf16.msra.mxu0 0
          %829 = vmatpush.bf16.msra.mxu0 0
          %830 = vmatpush.bf16.msra.mxu0 0
          %831 = vmatpush.bf16.msra.mxu0 0
          %832 = vmatpush.bf16.msra.mxu0 0
          %833 = vmatpush.bf16.msra.mxu0 0
          %834 = vmatpush.bf16.msra.mxu0 %v820
          %835 = vmatmul.bf16.gmra.mxu0 %v823
          %v836 = vpop.f32.mrf.mxu0
          %v837 = vadd.f32 %v814, %v836
          %v838 = vpop.f32.mrf.mxu0
          %v839 = vadd.f32 %v814, %v838
          %840 = vmatmul.bf16.gmra.mxu0 %v825
          %v841 = vpop.f32.mrf.mxu0
          %v842 = vadd.f32 %v814, %v841
          %v843 = vpop.f32.mrf.mxu0
          %v844 = vadd.f32 %v814, %v843
          %845 = vdwg.mxu0
          %v846 = vmax.f32 %v837, 0.0
          %v847 = vmax.f32 %v839, 0.0
          %v848 = vmax.f32 %v842, 0.0
          %v849 = vmax.f32 %v844, 0.0
          %v850 = vpack.c.bf16 %v847, %v846
          %v851 = vpack.c.bf16 %v849, %v848
          %v852 = vld [vmem:[%s6] sm:$0xf]
          %v853 = vld [vmem:[%s6 + $0x4] sm:$0xf]
          %v854 = vld [vmem:[%s6 + $0x8] sm:$0xf]
          %v855 = vld [vmem:[%s6 + $0xc] sm:$0xf]
          %v856 = vld [vmem:[%s7] sm:$0x1]
          %v858 = vperm.slane %v856, 0
          %v864 = vunpack.c.l.b16 %v852
          %v865 = vunpack.c.l.b16 %v853
          %v866 = vunpack.c.l.b16 %v854
          %v867 = vunpack.c.l.b16 %v855
          %v868 = vpack.c.b16 %v865, %v864
          %v869 = vpack.c.b16 %v867, %v866
          %vm872 = vcmask 261120
          %v874 = vsel %vm872, %v850, 0
          %v877 = vsel %vm872, %v851, 0
          %879 = vmatpush.bf16.msra.mxu0 0
          %880 = vmatpush.bf16.msra.mxu0 0
          %881 = vmatpush.bf16.msra.mxu0 0
          %882 = vmatpush.bf16.msra.mxu0 0
          %883 = vmatpush.bf16.msra.mxu0 0
          %884 = vmatpush.bf16.msra.mxu0 0
          %885 = vmatpush.bf16.msra.mxu0 %v869
          %886 = vmatpush.bf16.msra.mxu0 %v868
          %887 = vmatmul.bf16.gmra.mxu0 %v874
          %v888 = vpop.f32.mrf.mxu0
          %v889 = vadd.f32 %v858, %v888
          %v890 = vpop.f32.mrf.mxu0
          %v891 = vadd.f32 %v858, %v890
          %892 = vmatmul.bf16.gmra.mxu0 %v877
          %v893 = vpop.f32.mrf.mxu0
          %v894 = vadd.f32 %v858, %v893
          %v895 = vpop.f32.mrf.mxu0
          %v896 = vadd.f32 %v858, %v895
          %897 = vdwg.mxu0
          %v898 = vpack.c.bf16 %v889, %v889
          %v899 = vpack.c.bf16 %v891, %v891
          %v900 = vpack.c.bf16 %v894, %v894
          %v901 = vpack.c.bf16 %v896, %v896
          %v906 = vunpack.c.l.b16 %v898
          %v907 = vunpack.c.l.b16 %v899
          %v908 = vunpack.c.l.b16 %v900
          %v909 = vunpack.c.l.b16 %v901
          %v910 = vpack.c.b16 %v907, %v906
          %v911 = vpack.c.b16 %v909, %v908
          %912 = vrot.lane.b32.xlu0 %v797, 32
          %v913 = vpop.permute.xlu0 %912
          %914 = vrot.lane.b32.xlu0 %v798, 32
          %v915 = vpop.permute.xlu0 %914
          %v918 = vsel %vm872, %v910, %v913
          %v921 = vsel %vm872, %v911, %v915
          %v922 = vld [vmem:[%s8] sm:$0xf]
          %v923 = vld [vmem:[%s8 + $0x4] sm:$0xf]
          %v924 = vld [vmem:[%s8 + $0x8] sm:$0xf]
          %v925 = vld [vmem:[%s8 + $0xc] sm:$0xf]
          %v926 = vld [vmem:[%s8 + $0x10] sm:$0xf]
          %v927 = vld [vmem:[%s9] sm:$0x1]
          %v929 = vperm.slane %v927, 0
          %v936 = vunpack.c.l.b16 %v922
          %v937 = vunpack.c.l.b16 %v923
          %v938 = vunpack.c.l.b16 %v924
          %v939 = vunpack.c.l.b16 %v925
          %v940 = vunpack.c.l.b16 %v926
          %v941 = vpack.c.b16 %v937, %v936
          %v942 = vpack.c.b16 %v939, %v938
          %v943 = vpack.c.b16 %v940, %v940
          %vm946 = vcmask 326656
          %v947 = vsel %vm946, %v918, 0
          %v949 = vsel %vm946, %v921, 0
          %vm951 = vcmask 1043456
          %v953 = vsel %vm951, %v943, 0
          %955 = vmatpush.bf16.msra.mxu0 0
          %956 = vmatpush.bf16.msra.mxu0 0
          %957 = vmatpush.bf16.msra.mxu0 0
          %958 = vmatpush.bf16.msra.mxu0 0
          %959 = vmatpush.bf16.msra.mxu0 0
          %960 = vmatpush.bf16.msra.mxu0 %v953
          %961 = vmatpush.bf16.msra.mxu0 %v942
          %962 = vmatpush.bf16.msra.mxu0 %v941
          %963 = vmatmul.bf16.gmra.mxu0 %v947
          %v964 = vpop.f32.mrf.mxu0
          %v965 = vadd.f32 %v929, %v964
          %v966 = vpop.f32.mrf.mxu0
          %v967 = vadd.f32 %v929, %v966
          %968 = vmatmul.bf16.gmra.mxu0 %v949
          %v969 = vpop.f32.mrf.mxu0
          %v970 = vadd.f32 %v929, %v969
          %v971 = vpop.f32.mrf.mxu0
          %v972 = vadd.f32 %v929, %v971
          %973 = vdwg.mxu0
          %v974 = vmax.f32 %v965, 0.0
          %v975 = vmax.f32 %v967, 0.0
          %v976 = vmax.f32 %v970, 0.0
          %v977 = vmax.f32 %v972, 0.0
          %v978 = vpack.c.bf16 %v975, %v974
          %v979 = vpack.c.bf16 %v977, %v976
          %v980 = vld [vmem:[%s10] sm:$0xf]
          %v981 = vld [vmem:[%s10 + $0x4] sm:$0xf]
          %v982 = vld [vmem:[%s10 + $0x8] sm:$0xf]
          %v983 = vld [vmem:[%s10 + $0xc] sm:$0xf]
          %v984 = vld [vmem:[%s11] sm:$0x1]
          %v986 = vperm.slane %v984, 0
          %v992 = vunpack.c.l.b16 %v980
          %v993 = vunpack.c.l.b16 %v981
          %v994 = vunpack.c.l.b16 %v982
          %v995 = vunpack.c.l.b16 %v983
          %v996 = vpack.c.b16 %v993, %v992
          %v997 = vpack.c.b16 %v995, %v994
          %v1001 = vsel %vm872, %v978, 0
          %v1004 = vsel %vm872, %v979, 0
          %1006 = vmatpush.bf16.msra.mxu0 0
          %1007 = vmatpush.bf16.msra.mxu0 0
          %1008 = vmatpush.bf16.msra.mxu0 0
          %1009 = vmatpush.bf16.msra.mxu0 0
          %1010 = vmatpush.bf16.msra.mxu0 0
          %1011 = vmatpush.bf16.msra.mxu0 0
          %1012 = vmatpush.bf16.msra.mxu0 %v997
          %1013 = vmatpush.bf16.msra.mxu0 %v996
          %1014 = vmatmul.bf16.gmra.mxu0 %v1001
          %v1015 = vpop.f32.mrf.mxu0
          %v1016 = vadd.f32 %v986, %v1015
          %v1017 = vpop.f32.mrf.mxu0
          %v1018 = vadd.f32 %v986, %v1017
          %1019 = vmatmul.bf16.gmra.mxu0 %v1004
          %v1020 = vpop.f32.mrf.mxu0
          %v1021 = vadd.f32 %v986, %v1020
          %v1022 = vpop.f32.mrf.mxu0
          %v1023 = vadd.f32 %v986, %v1022
          %1024 = vdwg.mxu0
          %v1025 = vpack.c.bf16 %v1016, %v1016
          %v1026 = vpack.c.bf16 %v1018, %v1018
          %v1027 = vpack.c.bf16 %v1021, %v1021
          %v1028 = vpack.c.bf16 %v1023, %v1023
          %v1033 = vunpack.c.l.b16 %v1025
          %v1034 = vunpack.c.l.b16 %v1026
          %v1035 = vunpack.c.l.b16 %v1027
          %v1036 = vunpack.c.l.b16 %v1028
          %v1037 = vpack.c.b16 %v1034, %v1033
          %v1038 = vpack.c.b16 %v1036, %v1035
          %v1040 = vsel %vm872, %v1037, %v913
          %v1042 = vsel %vm872, %v1038, %v915
          %v1043 = vld [vmem:[%s12] sm:$0xf]
          %v1044 = vld [vmem:[%s12 + $0x4] sm:$0xf]
          %v1045 = vld [vmem:[%s12 + $0x8] sm:$0xf]
          %v1046 = vld [vmem:[%s12 + $0xc] sm:$0xf]
          %v1047 = vld [vmem:[%s12 + $0x10] sm:$0xf]
          %v1048 = vld [vmem:[%s13] sm:$0x1]
          %v1050 = vperm.slane %v1048, 0
          %v1057 = vunpack.c.l.b16 %v1043
          %v1058 = vunpack.c.l.b16 %v1044
          %v1059 = vunpack.c.l.b16 %v1045
          %v1060 = vunpack.c.l.b16 %v1046
          %v1061 = vunpack.c.l.b16 %v1047
          %v1062 = vpack.c.b16 %v1058, %v1057
          %v1063 = vpack.c.b16 %v1060, %v1059
          %v1064 = vpack.c.b16 %v1061, %v1061
          %v1067 = vsel %vm946, %v1040, 0
          %v1069 = vsel %vm946, %v1042, 0
          %v1072 = vsel %vm951, %v1064, 0
          %1074 = vmatpush.bf16.msra.mxu0 0
          %1075 = vmatpush.bf16.msra.mxu0 0
          %1076 = vmatpush.bf16.msra.mxu0 0
          %1077 = vmatpush.bf16.msra.mxu0 0
          %1078 = vmatpush.bf16.msra.mxu0 0
          %1079 = vmatpush.bf16.msra.mxu0 %v1072
          %1080 = vmatpush.bf16.msra.mxu0 %v1063
          %1081 = vmatpush.bf16.msra.mxu0 %v1062
          %1082 = vmatmul.bf16.gmra.mxu0 %v1067
          %v1083 = vpop.f32.mrf.mxu0
          %v1084 = vadd.f32 %v1050, %v1083
          %v1085 = vpop.f32.mrf.mxu0
          %v1086 = vadd.f32 %v1050, %v1085
          %1087 = vmatmul.bf16.gmra.mxu0 %v1069
          %v1088 = vpop.f32.mrf.mxu0
          %v1089 = vadd.f32 %v1050, %v1088
          %v1090 = vpop.f32.mrf.mxu0
          %v1091 = vadd.f32 %v1050, %v1090
          %1092 = vdwg.mxu0
          %v1093 = vmax.f32 %v1084, 0.0
          %v1094 = vmax.f32 %v1086, 0.0
          %v1095 = vmax.f32 %v1089, 0.0
          %v1096 = vmax.f32 %v1091, 0.0
          %v1097 = vpack.c.bf16 %v1094, %v1093
          %v1098 = vpack.c.bf16 %v1096, %v1095
          %v1099 = vld [vmem:[%s14] sm:$0xf]
          %v1100 = vld [vmem:[%s14 + $0x4] sm:$0xf]
          %v1101 = vld [vmem:[%s14 + $0x8] sm:$0xf]
          %v1102 = vld [vmem:[%s14 + $0xc] sm:$0xf]
          %v1103 = vld [vmem:[%s15] sm:$0x1]
          %v1105 = vperm.slane %v1103, 0
          %v1111 = vunpack.c.l.b16 %v1099
          %v1112 = vunpack.c.l.b16 %v1100
          %v1113 = vunpack.c.l.b16 %v1101
          %v1114 = vunpack.c.l.b16 %v1102
          %v1115 = vpack.c.b16 %v1112, %v1111
          %v1116 = vpack.c.b16 %v1114, %v1113
          %v1120 = vsel %vm872, %v1097, 0
          %v1123 = vsel %vm872, %v1098, 0
          %1125 = vmatpush.bf16.msra.mxu0 0
          %1126 = vmatpush.bf16.msra.mxu0 0
          %1127 = vmatpush.bf16.msra.mxu0 0
          %1128 = vmatpush.bf16.msra.mxu0 0
          %1129 = vmatpush.bf16.msra.mxu0 0
          %1130 = vmatpush.bf16.msra.mxu0 0
          %1131 = vmatpush.bf16.msra.mxu0 %v1116
          %1132 = vmatpush.bf16.msra.mxu0 %v1115
          %1133 = vmatmul.bf16.gmra.mxu0 %v1120
          %v1134 = vpop.f32.mrf.mxu0
          %v1135 = vadd.f32 %v1105, %v1134
          %v1136 = vpop.f32.mrf.mxu0
          %v1137 = vadd.f32 %v1105, %v1136
          %1138 = vmatmul.bf16.gmra.mxu0 %v1123
          %v1139 = vpop.f32.mrf.mxu0
          %v1140 = vadd.f32 %v1105, %v1139
          %v1141 = vpop.f32.mrf.mxu0
          %v1142 = vadd.f32 %v1105, %v1141
          %1143 = vdwg.mxu0
          %1144 = vst [vmem:[%s586] sm:$0xff] %v1135
          %1145 = vst [vmem:[%s586 + $0x8] sm:$0xff] %v1137
          %1146 = vst [vmem:[%s586 + $0x10] sm:$0xff] %v1140
          %1147 = vst [vmem:[%s586 + $0x18] sm:$0xff] %v1142
        $region92: #{tpu_custom_call.1} parent=79 // pred_fallthru
          _
        %s1148 = sand.u32 %s408, 1
        %s1149 = scalar_lea.sflag [#allocation6], %s1148
        %s1150 = sand.u32 %s408, 1
        %s1151 = smul.addr %s1150, 32
        %s1152 = scalar_lea.vmem [#allocation5], %s1151
        // Predicated region
        $region93: #{tpu_custom_call.1} parent=79 // pred_check
          %p1153 = pneg %p418
        $region94: #{tpu_custom_call.1} parent=79 // pred_check_branch
          %1155 = sbr.rel (%p1153) target = $region96
        $region95: #{tpu_custom_call.1} parent=79 // pred_region
          %s1156 = smul.u32 4, %s42
          %1158 = vsyncadd %s1149, 0
          %s1159 = smul.addr %s1156, 8
          %s1160 = scalar_lea.hbm %s16, %s1159
          %s1161 = sshll.u32 %s1152, 4
          %s1162 = int_to_ptr.vmem [resolvable:$true] %s1161
          %s1163 = sshll.u32 %s1160, 4
          %s1164 = int_to_ptr.hbm [resolvable:$true] %s1163
          %1169 = dma.vmem_to_hbm [thread:$0]  %s1162, 512, %s1164, %s1149, 128, 128, 8
        $region96: #{tpu_custom_call.1} parent=79 // pred_fallthru
          _
      $region80: #{tpu_custom_call.1} parent=5 // pred_fallthru
        _
      %p1170 = scmp.le.s32.totalorder 2, %s33
      // Predicated region
      $region97: #{tpu_custom_call.1} parent=5 // pred_check
        %p1171 = pneg %p1170
      $region98: #{tpu_custom_call.1} parent=5 // pred_check_branch
        %1173 = sbr.rel (%p1171) target = $region100
      $region99: #{tpu_custom_call.1} parent=5 // pred_region
        %s1174 = ssub.s32 %s33, 2
        // Predicated region
        $region101: #{tpu_custom_call.1} parent=99 // pred_check
          %p1175 = pneg %p424
        $region102: #{tpu_custom_call.1} parent=99 // pred_check_branch
          %1177 = sbr.rel (%p1175) target = $region104
        $region103: #{tpu_custom_call.1} parent=99 // pred_region
          %s1178 = sand.u32 %s409, 1
          %s1179 = scalar_lea.sflag [#allocation6], %s1178
          %s1180 = sand.u32 %s409, 1
          %s1181 = smul.addr %s1180, 32
          %s1182 = scalar_lea.vmem [#allocation5], %s1181
          %1184 = dma.done %s1179, 512
        $region104: #{tpu_custom_call.1} parent=99 // pred_fallthru
          _
      $region100: #{tpu_custom_call.1} parent=5 // pred_fallthru
        _
    $region6: #{tpu_custom_call.1} parent=1 // loop_footer
      %s37 = sadd.s32 1, %s33
    $region7: #{tpu_custom_call.1} parent=1 // loop_footer_branch
      %32 = sbr.rel target = $region3
    $region8: #{tpu_custom_call.1} parent=1 // loop_exit
      _
    %1185 = vsyncpa [#allocation6], 1
    %s1186 = scalar_lea.sflag [#allocation6], 1
    %1187 = vsyncpa %s1186, 1

</llo_original>
